<compile_context>
chip_gen: v7x
topology: tpu7x:2x2x1
jax: 0.10.0
libtpu: 0.0.40
codegen_flags: <defaults>
</compile_context>

<pallas_src>
import functools

import jax
import jax.numpy as jnp
from jax.experimental import pallas as pl
from jax.experimental.pallas import tpu as pltpu


# ----------------------------- Pallas kernel ------------------------------ #

def ffb_kernel(x_ref, w1_ref, w2_ref, w3_ref, w4_ref, w5_ref, sb_ref,
               out_ref, *, WC):
    """One batch element. Activations live as (H, W*C) lane-dense rows."""
    x = x_ref[0].astype(jnp.float32)                       # (H, W*Cin)

    def bnrelu(o, i):
        s = sb_ref[2 * i:2 * i + 1, :]                     # (1, W*C)
        b = sb_ref[2 * i + 1:2 * i + 2, :]
        return jnp.maximum(o * s + b, 0.0)

    def conv1x1(o, w_ref):
        return jnp.dot(o, w_ref[...], preferred_element_type=jnp.float32)

    def conv3x3(o, w_ref):
        # dh shifts: row h of `up` holds o[h-1], row h of `dn` holds o[h+1]
        # (zero-filled at the image border).  dw shifts are already folded
        # into the banded weight, so the whole conv is one K=3*W*C matmul.
        z = jnp.zeros((1, WC), jnp.float32)
        up = jnp.concatenate([z, o[:-1, :]], axis=0)       # (H, W*C)
        dn = jnp.concatenate([o[1:, :], z], axis=0)        # (H, W*C)
        win = jnp.concatenate([up, o, dn], axis=1)         # (H, 3*W*C)
        return jnp.dot(win, w_ref[...], preferred_element_type=jnp.float32)

    # conv1 (1x1, groups=4) + bn1 + relu
    o = bnrelu(conv1x1(x, w1_ref), 0)
    residual1 = o
    # conv2 (3x3, groups=2, pad=1) + bn2 + relu
    o = bnrelu(conv3x3(o, w2_ref), 1)
    residual2 = o
    # conv3 (1x1, groups=4) + bn3 + relu, then + residual1
    o = bnrelu(conv1x1(o, w3_ref), 2) + residual1
    # conv4 (3x3, groups=2, pad=1) + bn4 + relu, then + residual2
    o = bnrelu(conv3x3(o, w4_ref), 3) + residual2
    # conv5 (1x1, groups=4) + bn5 + relu
    o = bnrelu(conv1x1(o, w5_ref), 4)

    out_ref[0] = o.astype(out_ref.dtype)                   # lane-dense store


# -------------------- host-side weight re-layout helpers ------------------ #

def rep_blockdiag(w_cc, Wdim):
    """(Cin, Cout) 1x1 weight -> (W*Cin, W*Cout) W-replicated block diagonal."""
    return jnp.kron(jnp.eye(Wdim, dtype=jnp.float32), w_cc)


def banded_3x3(w_taps, Wdim):
    """(3, 3, C, C) dense taps -> (3*W*C, W*C) stacked banded matrices.

    Row-block d (dh = d-1) maps the dh-shifted activation row; the dw taps sit
    on the block tri-diagonal so zero padding in W is handled structurally.
    """
    mats = []
    for d in range(3):
        m = 0.0
        for dw in range(3):
            m = m + jnp.kron(jnp.eye(Wdim, k=1 - dw, dtype=jnp.float32),
                             w_taps[d, dw])
        mats.append(m)
    return jnp.concatenate(mats, axis=0)


# ------------------------------ Host wrapper ------------------------------ #

def ffb_forward(x_nhwc, params):
    N, H, W, Cin = x_nhwc.shape
    C = params["w1"].shape[1]
    WCin, WC = W * Cin, W * C

    # Fold W into the weight matrices so activations stay (H, W*C) lane-dense.
    w1b = rep_blockdiag(params["w1"], W)          # (W*Cin, W*C)
    w2b = banded_3x3(params["w2"], W)             # (3*W*C, W*C)
    w3b = rep_blockdiag(params["w3"], W)          # (W*C,  W*C)
    w4b = banded_3x3(params["w4"], W)             # (3*W*C, W*C)
    w5b = rep_blockdiag(params["w5"], W)          # (W*C,  W*C)

    # Pack the 10 BN scale/bias vectors into one lane-aligned (10, W*C) array.
    sb_rows = []
    for i in range(1, 6):
        sb_rows.append(jnp.tile(params[f"s{i}"], (1, W)))
        sb_rows.append(jnp.tile(params[f"b{i}"], (1, W)))
    sb = jnp.concatenate(sb_rows, axis=0)         # (10, W*C)

    x_rows = x_nhwc.reshape(N, H, WCin)           # lane-dense input rows

    kernel = functools.partial(ffb_kernel, WC=WC)

    def full(shape):
        return pl.BlockSpec(shape, lambda b, _n=len(shape): (0,) * _n)

    in_specs = [
        pl.BlockSpec((1, H, WCin), lambda b: (b, 0, 0)),   # x
        full((WCin, WC)),       # w1
        full((3 * WC, WC)),     # w2
        full((WC, WC)),         # w3
        full((3 * WC, WC)),     # w4
        full((WC, WC)),         # w5
        full((10, WC)),         # packed BN scale/bias
    ]

    fn = pl.pallas_call(
        kernel,
        out_shape=jax.ShapeDtypeStruct((N, H, WC), jnp.float32),
        grid_spec=pltpu.PrefetchScalarGridSpec(
            num_scalar_prefetch=0,
            grid=(N,),
            in_specs=in_specs,
            out_specs=pl.BlockSpec((1, H, WC), lambda b: (b, 0, 0)),
        ),
        compiler_params=pltpu.CompilerParams(
            dimension_semantics=("parallel",)),
    )
    out_rows = fn(x_rows, w1b, w2b, w3b, w4b, w5b, sb)
    return out_rows.reshape(N, H, W, C)


# ----------------------- deterministic parameter init --------------------- #

def grouped_1x1_dense(key, cin, cout, groups):
    """PyTorch Conv2d(cin, cout, 1, groups=groups).weight -> dense (cin, cout)."""
    cin_g, cout_g = cin // groups, cout // groups
    w = jax.random.normal(key, (cout, cin_g), jnp.float32) * 0.2
    dense = jnp.zeros((cin, cout), jnp.float32)
    for g in range(groups):
        blk = w[g * cout_g:(g + 1) * cout_g, :]          # (cout_g, cin_g)
        dense = dense.at[g * cin_g:(g + 1) * cin_g,
                         g * cout_g:(g + 1) * cout_g].set(blk.T)
    return dense


def grouped_3x3_dense(key, c, groups):
    """PyTorch Conv2d(c, c, 3, pad=1, groups=groups).weight -> dense (3,3,c,c)."""
    c_g = c // groups
    w = jax.random.normal(key, (c, c_g, 3, 3), jnp.float32) * 0.1
    dense = jnp.zeros((3, 3, c, c), jnp.float32)
    for g in range(groups):
        blk = w[g * c_g:(g + 1) * c_g]                   # (c_g, c_g, 3, 3)
        dense = dense.at[:, :, g * c_g:(g + 1) * c_g,
                         g * c_g:(g + 1) * c_g].set(jnp.transpose(blk, (2, 3, 1, 0)))
    return dense


def bn_scale_bias(key, c, eps=1e-5):
    k1, k2, k3, k4 = jax.random.split(key, 4)
    gamma = 1.0 + 0.1 * jax.random.normal(k1, (c,), jnp.float32)
    beta = 0.1 * jax.random.normal(k2, (c,), jnp.float32)
    mean = 0.1 * jax.random.normal(k3, (c,), jnp.float32)
    var = 1.0 + 0.1 * jax.random.uniform(k4, (c,), jnp.float32)
    scale = gamma / jnp.sqrt(var + eps)
    bias = beta - mean * scale
    return scale.reshape(1, c), bias.reshape(1, c)


def make_params(key, inplanes, planes):
    ks = jax.random.split(key, 10)
    params = {
        "w1": grouped_1x1_dense(ks[0], inplanes, planes, groups=4),
        "w2": grouped_3x3_dense(ks[1], planes, groups=2),
        "w3": grouped_1x1_dense(ks[2], planes, planes, groups=4),
        "w4": grouped_3x3_dense(ks[3], planes, groups=2),
        "w5": grouped_1x1_dense(ks[4], planes, planes, groups=4),
    }
    for i in range(5):
        s, b = bn_scale_bias(ks[5 + i], planes)
        params[f"s{i + 1}"] = s
        params[f"b{i + 1}"] = b
    return params


# ------------------------------ pure-JAX ref ------------------------------ #

def ffb_reference(x_nhwc, p):
    N, H, W, Cin = x_nhwc.shape
    C = p["w1"].shape[1]

    def conv1x1(o, w):
        return jnp.einsum("nhwc,cd->nhwd", o, w)

    def conv3x3(o, w):
        xp = jnp.pad(o, ((0, 0), (1, 1), (1, 1), (0, 0)))
        acc = jnp.zeros((N, H, W, C), jnp.float32)
        for dh in range(3):
            for dw in range(3):
                acc += jnp.einsum("nhwc,cd->nhwd",
                                  xp[:, dh:dh + H, dw:dw + W, :], w[dh, dw])
        return acc

    def bnrelu(o, s, b):
        return jnp.maximum(o * s.reshape(1, 1, 1, C) + b.reshape(1, 1, 1, C), 0.0)

    o = bnrelu(conv1x1(x_nhwc, p["w1"]), p["s1"], p["b1"]); r1 = o
    o = bnrelu(conv3x3(o, p["w2"]), p["s2"], p["b2"]); r2 = o
    o = bnrelu(conv1x1(o, p["w3"]), p["s3"], p["b3"]) + r1
    o = bnrelu(conv3x3(o, p["w4"]), p["s4"], p["b4"]) + r2
    o = bnrelu(conv1x1(o, p["w5"]), p["s5"], p["b5"])
    return o


# ---------------------------------- main ----------------------------------- #

if __name__ == "__main__":
    # stride=1, downsample=None; W*planes = 128 -> fully lane-dense rows.
    N, inplanes, planes, H, W = 2, 8, 8, 16, 16

    key = jax.random.PRNGKey(0)
    kx, kp = jax.random.split(key)
    x_nchw = jax.random.normal(kx, (N, inplanes, H, W), jnp.float32)  # PyTorch layout
    x_nhwc = jnp.transpose(x_nchw, (0, 2, 3, 1))                      # kernel layout

    params = make_params(kp, inplanes, planes)

    out = ffb_forward(x_nhwc, params)
    out = jax.block_until_ready(out)

    ref = ffb_reference(x_nhwc, params)
    assert out.shape == (N, H, W, planes)
    assert jnp.allclose(out, ref, rtol=1e-5, atol=1e-5)

    print("KERNEL_OK")
</pallas_src>

<mosaic_0001>
module attributes {stable_mosaic.version = 11 : i64} {
  func.func @ffb_kernel(%arg0: i32, %arg1: memref<1x16x128xf32, #tpu.memory_space<vmem>>, %arg2: memref<128x128xf32, #tpu.memory_space<vmem>>, %arg3: memref<384x128xf32, #tpu.memory_space<vmem>>, %arg4: memref<128x128xf32, #tpu.memory_space<vmem>>, %arg5: memref<384x128xf32, #tpu.memory_space<vmem>>, %arg6: memref<128x128xf32, #tpu.memory_space<vmem>>, %arg7: memref<10x128xf32, #tpu.memory_space<vmem>>, %arg8: memref<1x16x128xf32, #tpu.memory_space<vmem>>) attributes {dimension_semantics = [#tpu.dimension_semantics<parallel>], iteration_bounds = array<i64: 2>, scalar_prefetch = 0 : i64, scratch_operands = 0 : i64, tpu.core_type = #tpu.core_type<tc>, window_params = [{transform_indices = @transform_0, window_bounds = array<i64: 1, 16, 128>}, {pipeline_mode = #tpu.pipeline_mode<synchronous>, transform_indices = @transform_1, window_bounds = array<i64: 128, 128>}, {pipeline_mode = #tpu.pipeline_mode<synchronous>, transform_indices = @transform_2, window_bounds = array<i64: 384, 128>}, {pipeline_mode = #tpu.pipeline_mode<synchronous>, transform_indices = @transform_3, window_bounds = array<i64: 128, 128>}, {pipeline_mode = #tpu.pipeline_mode<synchronous>, transform_indices = @transform_4, window_bounds = array<i64: 384, 128>}, {pipeline_mode = #tpu.pipeline_mode<synchronous>, transform_indices = @transform_5, window_bounds = array<i64: 128, 128>}, {pipeline_mode = #tpu.pipeline_mode<synchronous>, transform_indices = @transform_6, window_bounds = array<i64: 10, 128>}, {transform_indices = @transform_7, window_bounds = array<i64: 1, 16, 128>}]} {
    %c0 = arith.constant 0 : index
    %c0_0 = arith.constant 0 : index
    %c0_1 = arith.constant 0 : index
    %0 = vector.load %arg1[%c0, %c0_0, %c0_1] : memref<1x16x128xf32, #tpu.memory_space<vmem>>, vector<1x16x128xf32>
    %1 = vector.shape_cast %0 : vector<1x16x128xf32> to vector<16x128xf32>
    %c0_2 = arith.constant 0 : index
    %c0_3 = arith.constant 0 : index
    %2 = vector.load %arg2[%c0_2, %c0_3] : memref<128x128xf32, #tpu.memory_space<vmem>>, vector<128x128xf32>
    %cst = arith.constant dense<0.000000e+00> : vector<16x128xf32>
    %3 = tpu.matmul %1, %2, %cst {dimension_numbers = #tpu.dot_dimension_numbers<[1], [0], [0], [1], [0, 0, 1, 1], [], []>} : vector<16x128xf32>, vector<128x128xf32>, vector<16x128xf32> -> vector<16x128xf32>
    %c0_4 = arith.constant 0 : index
    %c0_5 = arith.constant 0 : index
    %4 = vector.load %arg7[%c0_4, %c0_5] : memref<10x128xf32, #tpu.memory_space<vmem>>, vector<1x128xf32>
    %c1 = arith.constant 1 : index
    %c0_6 = arith.constant 0 : index
    %5 = vector.load %arg7[%c1, %c0_6] : memref<10x128xf32, #tpu.memory_space<vmem>>, vector<1x128xf32>
    %6 = vector.broadcast %4 : vector<1x128xf32> to vector<16x128xf32>
    %7 = arith.mulf %3, %6 : vector<16x128xf32>
    %8 = vector.broadcast %5 : vector<1x128xf32> to vector<16x128xf32>
    %9 = arith.addf %7, %8 : vector<16x128xf32>
    %cst_7 = arith.constant 0.000000e+00 : f32
    %10 = vector.broadcast %cst_7 : f32 to vector<16x128xf32>
    %11 = arith.maximumf %9, %10 : vector<16x128xf32>
    %cst_8 = arith.constant 0.000000e+00 : f32
    %12 = vector.broadcast %cst_8 : f32 to vector<1x128xf32>
    %13 = vector.extract_strided_slice %11 {offsets = [0, 0], sizes = [15, 128], strides = [1, 1]} : vector<16x128xf32> to vector<15x128xf32>
    %14 = tpu.concatenate %12, %13 in 0 : vector<1x128xf32>, vector<15x128xf32> -> vector<16x128xf32>
    %15 = vector.extract_strided_slice %11 {offsets = [1, 0], sizes = [15, 128], strides = [1, 1]} : vector<16x128xf32> to vector<15x128xf32>
    %16 = tpu.concatenate %15, %12 in 0 : vector<15x128xf32>, vector<1x128xf32> -> vector<16x128xf32>
    %17 = tpu.concatenate %14, %11, %16 in 1 : vector<16x128xf32>, vector<16x128xf32>, vector<16x128xf32> -> vector<16x384xf32>
    %c0_9 = arith.constant 0 : index
    %c0_10 = arith.constant 0 : index
    %18 = vector.load %arg3[%c0_9, %c0_10] : memref<384x128xf32, #tpu.memory_space<vmem>>, vector<384x128xf32>
    %cst_11 = arith.constant dense<0.000000e+00> : vector<16x128xf32>
    %19 = tpu.matmul %17, %18, %cst_11 {dimension_numbers = #tpu.dot_dimension_numbers<[1], [0], [0], [1], [0, 0, 1, 1], [], []>} : vector<16x384xf32>, vector<384x128xf32>, vector<16x128xf32> -> vector<16x128xf32>
    %c2 = arith.constant 2 : index
    %c0_12 = arith.constant 0 : index
    %20 = vector.load %arg7[%c2, %c0_12] : memref<10x128xf32, #tpu.memory_space<vmem>>, vector<1x128xf32>
    %c3 = arith.constant 3 : index
    %c0_13 = arith.constant 0 : index
    %21 = vector.load %arg7[%c3, %c0_13] : memref<10x128xf32, #tpu.memory_space<vmem>>, vector<1x128xf32>
    %22 = vector.broadcast %20 : vector<1x128xf32> to vector<16x128xf32>
    %23 = arith.mulf %19, %22 : vector<16x128xf32>
    %24 = vector.broadcast %21 : vector<1x128xf32> to vector<16x128xf32>
    %25 = arith.addf %23, %24 : vector<16x128xf32>
    %cst_14 = arith.constant 0.000000e+00 : f32
    %26 = vector.broadcast %cst_14 : f32 to vector<16x128xf32>
    %27 = arith.maximumf %25, %26 : vector<16x128xf32>
    %c0_15 = arith.constant 0 : index
    %c0_16 = arith.constant 0 : index
    %28 = vector.load %arg4[%c0_15, %c0_16] : memref<128x128xf32, #tpu.memory_space<vmem>>, vector<128x128xf32>
    %cst_17 = arith.constant dense<0.000000e+00> : vector<16x128xf32>
    %29 = tpu.matmul %27, %28, %cst_17 {dimension_numbers = #tpu.dot_dimension_numbers<[1], [0], [0], [1], [0, 0, 1, 1], [], []>} : vector<16x128xf32>, vector<128x128xf32>, vector<16x128xf32> -> vector<16x128xf32>
    %c4 = arith.constant 4 : index
    %c0_18 = arith.constant 0 : index
    %30 = vector.load %arg7[%c4, %c0_18] : memref<10x128xf32, #tpu.memory_space<vmem>>, vector<1x128xf32>
    %c5 = arith.constant 5 : index
    %c0_19 = arith.constant 0 : index
    %31 = vector.load %arg7[%c5, %c0_19] : memref<10x128xf32, #tpu.memory_space<vmem>>, vector<1x128xf32>
    %32 = vector.broadcast %30 : vector<1x128xf32> to vector<16x128xf32>
    %33 = arith.mulf %29, %32 : vector<16x128xf32>
    %34 = vector.broadcast %31 : vector<1x128xf32> to vector<16x128xf32>
    %35 = arith.addf %33, %34 : vector<16x128xf32>
    %cst_20 = arith.constant 0.000000e+00 : f32
    %36 = vector.broadcast %cst_20 : f32 to vector<16x128xf32>
    %37 = arith.maximumf %35, %36 : vector<16x128xf32>
    %38 = arith.addf %37, %11 : vector<16x128xf32>
    %cst_21 = arith.constant 0.000000e+00 : f32
    %39 = vector.broadcast %cst_21 : f32 to vector<1x128xf32>
    %40 = vector.extract_strided_slice %38 {offsets = [0, 0], sizes = [15, 128], strides = [1, 1]} : vector<16x128xf32> to vector<15x128xf32>
    %41 = tpu.concatenate %39, %40 in 0 : vector<1x128xf32>, vector<15x128xf32> -> vector<16x128xf32>
    %42 = vector.extract_strided_slice %38 {offsets = [1, 0], sizes = [15, 128], strides = [1, 1]} : vector<16x128xf32> to vector<15x128xf32>
    %43 = tpu.concatenate %42, %39 in 0 : vector<15x128xf32>, vector<1x128xf32> -> vector<16x128xf32>
    %44 = tpu.concatenate %41, %38, %43 in 1 : vector<16x128xf32>, vector<16x128xf32>, vector<16x128xf32> -> vector<16x384xf32>
    %c0_22 = arith.constant 0 : index
    %c0_23 = arith.constant 0 : index
    %45 = vector.load %arg5[%c0_22, %c0_23] : memref<384x128xf32, #tpu.memory_space<vmem>>, vector<384x128xf32>
    %cst_24 = arith.constant dense<0.000000e+00> : vector<16x128xf32>
    %46 = tpu.matmul %44, %45, %cst_24 {dimension_numbers = #tpu.dot_dimension_numbers<[1], [0], [0], [1], [0, 0, 1, 1], [], []>} : vector<16x384xf32>, vector<384x128xf32>, vector<16x128xf32> -> vector<16x128xf32>
    %c6 = arith.constant 6 : index
    %c0_25 = arith.constant 0 : index
    %47 = vector.load %arg7[%c6, %c0_25] : memref<10x128xf32, #tpu.memory_space<vmem>>, vector<1x128xf32>
    %c7 = arith.constant 7 : index
    %c0_26 = arith.constant 0 : index
    %48 = vector.load %arg7[%c7, %c0_26] : memref<10x128xf32, #tpu.memory_space<vmem>>, vector<1x128xf32>
    %49 = vector.broadcast %47 : vector<1x128xf32> to vector<16x128xf32>
    %50 = arith.mulf %46, %49 : vector<16x128xf32>
    %51 = vector.broadcast %48 : vector<1x128xf32> to vector<16x128xf32>
    %52 = arith.addf %50, %51 : vector<16x128xf32>
    %cst_27 = arith.constant 0.000000e+00 : f32
    %53 = vector.broadcast %cst_27 : f32 to vector<16x128xf32>
    %54 = arith.maximumf %52, %53 : vector<16x128xf32>
    %55 = arith.addf %54, %27 : vector<16x128xf32>
    %c0_28 = arith.constant 0 : index
    %c0_29 = arith.constant 0 : index
    %56 = vector.load %arg6[%c0_28, %c0_29] : memref<128x128xf32, #tpu.memory_space<vmem>>, vector<128x128xf32>
    %cst_30 = arith.constant dense<0.000000e+00> : vector<16x128xf32>
    %57 = tpu.matmul %55, %56, %cst_30 {dimension_numbers = #tpu.dot_dimension_numbers<[1], [0], [0], [1], [0, 0, 1, 1], [], []>} : vector<16x128xf32>, vector<128x128xf32>, vector<16x128xf32> -> vector<16x128xf32>
    %c8 = arith.constant 8 : index
    %c0_31 = arith.constant 0 : index
    %58 = vector.load %arg7[%c8, %c0_31] : memref<10x128xf32, #tpu.memory_space<vmem>>, vector<1x128xf32>
    %c9 = arith.constant 9 : index
    %c0_32 = arith.constant 0 : index
    %59 = vector.load %arg7[%c9, %c0_32] : memref<10x128xf32, #tpu.memory_space<vmem>>, vector<1x128xf32>
    %60 = vector.broadcast %58 : vector<1x128xf32> to vector<16x128xf32>
    %61 = arith.mulf %57, %60 : vector<16x128xf32>
    %62 = vector.broadcast %59 : vector<1x128xf32> to vector<16x128xf32>
    %63 = arith.addf %61, %62 : vector<16x128xf32>
    %cst_33 = arith.constant 0.000000e+00 : f32
    %64 = vector.broadcast %cst_33 : f32 to vector<16x128xf32>
    %65 = arith.maximumf %63, %64 : vector<16x128xf32>
    %c0_34 = arith.constant 0 : index
    %c0_35 = arith.constant 0 : index
    %c0_36 = arith.constant 0 : index
    %66 = vector.load %arg8[%c0_34, %c0_35, %c0_36] : memref<1x16x128xf32, #tpu.memory_space<vmem>>, vector<1x16x128xf32>
    %67 = vector.shape_cast %66 : vector<1x16x128xf32> to vector<16x128xf32>
    %68 = vector.shape_cast %65 : vector<16x128xf32> to vector<1x16x128xf32>
    tpu.vector_store %arg8[%c0_34, %c0_35, %c0_36], %68 {strides = array<i32>} : memref<1x16x128xf32, #tpu.memory_space<vmem>>, vector<1x16x128xf32>,
    return
  }
  func.func @transform_0(%arg0: i32) -> (i32, i32, i32) {
    %c0_i32 = arith.constant 0 : i32
    %c0_i32_0 = arith.constant 0 : i32
    %c0_i32_1 = arith.constant 0 : i32
    return %arg0, %c0_i32, %c0_i32_0 : i32, i32, i32
  }
  func.func @transform_1(%arg0: i32) -> (i32, i32) {
    %c0_i32 = arith.constant 0 : i32
    %c0_i32_0 = arith.constant 0 : i32
    %c0_i32_1 = arith.constant 0 : i32
    return %c0_i32, %c0_i32_0 : i32, i32
  }
  func.func @transform_2(%arg0: i32) -> (i32, i32) {
    %c0_i32 = arith.constant 0 : i32
    %c0_i32_0 = arith.constant 0 : i32
    %c0_i32_1 = arith.constant 0 : i32
    return %c0_i32, %c0_i32_0 : i32, i32
  }
  func.func @transform_3(%arg0: i32) -> (i32, i32) {
    %c0_i32 = arith.constant 0 : i32
    %c0_i32_0 = arith.constant 0 : i32
    %c0_i32_1 = arith.constant 0 : i32
    return %c0_i32, %c0_i32_0 : i32, i32
  }
  func.func @transform_4(%arg0: i32) -> (i32, i32) {
    %c0_i32 = arith.constant 0 : i32
    %c0_i32_0 = arith.constant 0 : i32
    %c0_i32_1 = arith.constant 0 : i32
    return %c0_i32, %c0_i32_0 : i32, i32
  }
  func.func @transform_5(%arg0: i32) -> (i32, i32) {
    %c0_i32 = arith.constant 0 : i32
    %c0_i32_0 = arith.constant 0 : i32
    %c0_i32_1 = arith.constant 0 : i32
    return %c0_i32, %c0_i32_0 : i32, i32
  }
  func.func @transform_6(%arg0: i32) -> (i32, i32) {
    %c0_i32 = arith.constant 0 : i32
    %c0_i32_0 = arith.constant 0 : i32
    %c0_i32_1 = arith.constant 0 : i32
    return %c0_i32, %c0_i32_0 : i32, i32
  }
  func.func @transform_7(%arg0: i32) -> (i32, i32, i32) {
    %c0_i32 = arith.constant 0 : i32
    %c0_i32_0 = arith.constant 0 : i32
    %c0_i32_1 = arith.constant 0 : i32
    return %arg0, %c0_i32, %c0_i32_0 : i32, i32, i32
  }
}

</mosaic_0001>

<llo_original>
// kernel: tpu_custom_call.1
$region0: #{tpu_custom_call.1}
  #allocation0 [shape = 'u32[]', space=smem, size = 0x4, offset = 0x4, fixed_abs, tag = 'smem constant byte address 0x4 - core index']
  #allocation1 [shape = 'u32[144,128]{1,0:T(1,128)}', space=vmem, size = 0x12000, scoped, tag = 'internal scratch']
  %s0 = inlined_call_operand.hbm [shape: f32[2,16,128], index: 0, kind: input, shape index: {}]
  %s1 = inlined_call_operand.hbm [shape: f32[128,128], index: 1, kind: input, shape index: {}]
  %s2 = inlined_call_operand.hbm [shape: f32[384,128], index: 2, kind: input, shape index: {}]
  %s3 = inlined_call_operand.hbm [shape: f32[128,128], index: 3, kind: input, shape index: {}]
  %s4 = inlined_call_operand.hbm [shape: f32[384,128], index: 4, kind: input, shape index: {}]
  %s5 = inlined_call_operand.hbm [shape: f32[128,128], index: 5, kind: input, shape index: {}]
  %s6 = inlined_call_operand.vmem [shape: f32[10,128], index: 6, kind: input, shape index: {}]
  %s7 = inlined_call_operand.hbm [shape: f32[2,16,128], index: 7, kind: output, shape index: {}]
  %s8 = sld [smem:[#allocation0]]
  $region85: #{tpu_custom_call.1} parent=0
    _
  %s10 = ssub.s32 1, %s8
  %s11 = scalar_select 0, %s10, %s8
  $region1: #{tpu_custom_call.1} parent=0
    #allocation2 [shape = 'u8[16384]{0}', space=vmem, size = 0x4000, scoped, tag = 'input window, operand 0']
    #allocation3 [shape = 's32[2]{0}', space=sflag, size = 0x8, scoped, tag = 'scoped memory for tpu_custom_call.1']
    #allocation4 [shape = 's32[2]{0}', space=sflag, size = 0x8, scoped, tag = 'scoped memory for tpu_custom_call.1']
    #allocation5 [shape = 'u8[65536]{0}', space=vmem, size = 0x10000, scoped, tag = 'input window, operand 1, single buffered']
    #allocation6 [shape = 's32[1]{0}', space=sflag, size = 0x4, scoped, tag = 'scoped memory for tpu_custom_call.1']
    #allocation7 [shape = 'u8[196608]{0}', space=vmem, size = 0x30000, scoped, tag = 'input window, operand 2, single buffered']
    #allocation8 [shape = 'u8[65536]{0}', space=vmem, size = 0x10000, scoped, tag = 'input window, operand 3, single buffered']
    #allocation9 [shape = 's32[1]{0}', space=sflag, size = 0x4, scoped, tag = 'scoped memory for tpu_custom_call.1']
    #allocation10 [shape = 'u8[196608]{0}', space=vmem, size = 0x30000, scoped, tag = 'input window, operand 4, single buffered']
    #allocation11 [shape = 'u8[65536]{0}', space=vmem, size = 0x10000, scoped, tag = 'input window, operand 5, single buffered']
    #allocation12 [shape = 's32[1]{0}', space=sflag, size = 0x4, scoped, tag = 'scoped memory for tpu_custom_call.1']
    #allocation13 [shape = 'u8[16384]{0}', space=vmem, size = 0x4000, scoped, tag = 'output window, operand 0']
    %12 = vsyncpa [#allocation3], 0
    %s13 = scalar_lea.sflag [#allocation3], 1
    %14 = vsyncpa %s13, 0
    %15 = vsyncpa [#allocation6], 0
    %16 = vsyncpa [#allocation9], 0
    %17 = vsyncpa [#allocation12], 0
    %18 = vsyncpa [#allocation4], 0
    %s19 = scalar_lea.sflag [#allocation4], 1
    %20 = vsyncpa %s19, 0
    loop: start=0, step=1, limit=4
    $region2: #{tpu_custom_call.1} parent=1 // loop_pre_header
      _
    $region3: #{tpu_custom_call.1} parent=1 // loop_header
      %s22 = sphi 0, %s26
      %p23 = scmp.ge.s32.totalorder %s22, 4
      %s32 = sphi 0, %s34
      %s35 = sphi 0, %s32
      %s36 = sphi 0, %s35
      %s52 = sphi 0, %s36
      %s56 = sphi 0, %s56
      %s58 = sphi 0, %s56
      %s59 = sphi 0, %s58
      %s73 = sphi 0, %s59
      %s77 = sphi 0, %s77
      %s79 = sphi 0, %s77
      %s80 = sphi 0, %s79
      %s94 = sphi 0, %s80
      %s98 = sphi 0, %s98
      %s100 = sphi 0, %s98
      %s101 = sphi 0, %s100
      %s115 = sphi 0, %s101
      %s119 = sphi 0, %s119
      %s121 = sphi 0, %s119
      %s122 = sphi 0, %s121
      %s136 = sphi 0, %s122
      %s140 = sphi 0, %s140
      %s142 = sphi 0, %s140
      %s143 = sphi 0, %s142
      %s157 = sphi 0, %s143
      %s161 = sphi 0, %s161
      %s163 = sphi 0, %s161
      %s164 = sphi 0, %s163
      %s178 = sphi 0, %s164
      %s184 = sphi 0, %s186
      %s187 = sphi 0, %s184
      %s188 = sphi 0, %s187
      %s204 = sphi 0, %s188
    $region4: #{tpu_custom_call.1} parent=1 // loop_header_branch
      %25 = sbr.rel (%p23) target = $region8
    $region5: #{tpu_custom_call.1} parent=1 // loop_body
      %s27 = ssub.s32 %s22, 1
      %s28 = ssub.s32 %s22, 2
      %s29 = sadd.s32 %s22, 1
      %s30 = ssub.s32 %s22, %s29
      %p31 = scmp.eq.s32.totalorder %s30, 0
      %s33 = sadd.s32 %s32, 1
      %s34 = scalar_select %p31, %s32, %s33
      %p37 = pneg %p31
      %p38 = scmp.eq.s32.totalorder %s22, 1
      %p39 = por %p37, %p38
      %p40 = scmp.ne.s32.totalorder %s32, %s35
      %p41 = scmp.eq.s32.totalorder %s22, 0
      %p42 = por %p40, %p41
      %p43 = scmp.ne.s32.totalorder %s32, %s35
      %p44 = scmp.eq.s32.totalorder %s27, 1
      %p45 = por %p43, %p44
      %p46 = scmp.ne.s32.totalorder %s35, %s36
      %p47 = scmp.eq.s32.totalorder %s27, 0
      %p48 = por %p46, %p47
      %p49 = scmp.ne.s32.totalorder %s35, %s36
      %p50 = scmp.eq.s32.totalorder %s28, 1
      %p51 = por %p49, %p50
      %p53 = scmp.ne.s32.totalorder %s36, %s52
      %p54 = scmp.eq.s32.totalorder %s28, 0
      %p55 = por %p53, %p54
      %s57 = sadd.s32 %s56, 1
      %p60 = scmp.eq.s32.totalorder %s22, 1
      %p61 = scmp.ne.s32.totalorder %s56, %s58
      %p62 = scmp.eq.s32.totalorder %s22, 0
      %p63 = por %p61, %p62
      %p64 = scmp.ne.s32.totalorder %s56, %s58
      %p65 = scmp.eq.s32.totalorder %s27, 1
      %p66 = por %p64, %p65
      %p67 = scmp.ne.s32.totalorder %s58, %s59
      %p68 = scmp.eq.s32.totalorder %s27, 0
      %p69 = por %p67, %p68
      %p70 = scmp.ne.s32.totalorder %s58, %s59
      %p71 = scmp.eq.s32.totalorder %s28, 1
      %p72 = por %p70, %p71
      %p74 = scmp.ne.s32.totalorder %s59, %s73
      %p75 = scmp.eq.s32.totalorder %s28, 0
      %p76 = por %p74, %p75
      %s78 = sadd.s32 %s77, 1
      %p81 = scmp.eq.s32.totalorder %s22, 1
      %p82 = scmp.ne.s32.totalorder %s77, %s79
      %p83 = scmp.eq.s32.totalorder %s22, 0
      %p84 = por %p82, %p83
      %p85 = scmp.ne.s32.totalorder %s77, %s79
      %p86 = scmp.eq.s32.totalorder %s27, 1
      %p87 = por %p85, %p86
      %p88 = scmp.ne.s32.totalorder %s79, %s80
      %p89 = scmp.eq.s32.totalorder %s27, 0
      %p90 = por %p88, %p89
      %p91 = scmp.ne.s32.totalorder %s79, %s80
      %p92 = scmp.eq.s32.totalorder %s28, 1
      %p93 = por %p91, %p92
      %p95 = scmp.ne.s32.totalorder %s80, %s94
      %p96 = scmp.eq.s32.totalorder %s28, 0
      %p97 = por %p95, %p96
      %s99 = sadd.s32 %s98, 1
      %p102 = scmp.eq.s32.totalorder %s22, 1
      %p103 = scmp.ne.s32.totalorder %s98, %s100
      %p104 = scmp.eq.s32.totalorder %s22, 0
      %p105 = por %p103, %p104
      %p106 = scmp.ne.s32.totalorder %s98, %s100
      %p107 = scmp.eq.s32.totalorder %s27, 1
      %p108 = por %p106, %p107
      %p109 = scmp.ne.s32.totalorder %s100, %s101
      %p110 = scmp.eq.s32.totalorder %s27, 0
      %p111 = por %p109, %p110
      %p112 = scmp.ne.s32.totalorder %s100, %s101
      %p113 = scmp.eq.s32.totalorder %s28, 1
      %p114 = por %p112, %p113
      %p116 = scmp.ne.s32.totalorder %s101, %s115
      %p117 = scmp.eq.s32.totalorder %s28, 0
      %p118 = por %p116, %p117
      %s120 = sadd.s32 %s119, 1
      %p123 = scmp.eq.s32.totalorder %s22, 1
      %p124 = scmp.ne.s32.totalorder %s119, %s121
      %p125 = scmp.eq.s32.totalorder %s22, 0
      %p126 = por %p124, %p125
      %p127 = scmp.ne.s32.totalorder %s119, %s121
      %p128 = scmp.eq.s32.totalorder %s27, 1
      %p129 = por %p127, %p128
      %p130 = scmp.ne.s32.totalorder %s121, %s122
      %p131 = scmp.eq.s32.totalorder %s27, 0
      %p132 = por %p130, %p131
      %p133 = scmp.ne.s32.totalorder %s121, %s122
      %p134 = scmp.eq.s32.totalorder %s28, 1
      %p135 = por %p133, %p134
      %p137 = scmp.ne.s32.totalorder %s122, %s136
      %p138 = scmp.eq.s32.totalorder %s28, 0
      %p139 = por %p137, %p138
      %s141 = sadd.s32 %s140, 1
      %p144 = scmp.eq.s32.totalorder %s22, 1
      %p145 = scmp.ne.s32.totalorder %s140, %s142
      %p146 = scmp.eq.s32.totalorder %s22, 0
      %p147 = por %p145, %p146
      %p148 = scmp.ne.s32.totalorder %s140, %s142
      %p149 = scmp.eq.s32.totalorder %s27, 1
      %p150 = por %p148, %p149
      %p151 = scmp.ne.s32.totalorder %s142, %s143
      %p152 = scmp.eq.s32.totalorder %s27, 0
      %p153 = por %p151, %p152
      %p154 = scmp.ne.s32.totalorder %s142, %s143
      %p155 = scmp.eq.s32.totalorder %s28, 1
      %p156 = por %p154, %p155
      %p158 = scmp.ne.s32.totalorder %s143, %s157
      %p159 = scmp.eq.s32.totalorder %s28, 0
      %p160 = por %p158, %p159
      %s162 = sadd.s32 %s161, 1
      %p165 = scmp.eq.s32.totalorder %s22, 1
      %p166 = scmp.ne.s32.totalorder %s161, %s163
      %p167 = scmp.eq.s32.totalorder %s22, 0
      %p168 = por %p166, %p167
      %p169 = scmp.ne.s32.totalorder %s161, %s163
      %p170 = scmp.eq.s32.totalorder %s27, 1
      %p171 = por %p169, %p170
      %p172 = scmp.ne.s32.totalorder %s163, %s164
      %p173 = scmp.eq.s32.totalorder %s27, 0
      %p174 = por %p172, %p173
      %p175 = scmp.ne.s32.totalorder %s163, %s164
      %p176 = scmp.eq.s32.totalorder %s28, 1
      %p177 = por %p175, %p176
      %p179 = scmp.ne.s32.totalorder %s164, %s178
      %p180 = scmp.eq.s32.totalorder %s28, 0
      %p181 = por %p179, %p180
      %s182 = ssub.s32 %s22, %s29
      %p183 = scmp.eq.s32.totalorder %s182, 0
      %s185 = sadd.s32 %s184, 1
      %s186 = scalar_select %p183, %s184, %s185
      %p189 = pneg %p183
      %p190 = scmp.eq.s32.totalorder %s22, 1
      %p191 = por %p189, %p190
      %p192 = scmp.ne.s32.totalorder %s184, %s187
      %p193 = scmp.eq.s32.totalorder %s22, 0
      %p194 = por %p192, %p193
      %p195 = scmp.ne.s32.totalorder %s184, %s187
      %p196 = scmp.eq.s32.totalorder %s27, 1
      %p197 = por %p195, %p196
      %p198 = scmp.ne.s32.totalorder %s187, %s188
      %p199 = scmp.eq.s32.totalorder %s27, 0
      %p200 = por %p198, %p199
      %p201 = scmp.ne.s32.totalorder %s187, %s188
      %p202 = scmp.eq.s32.totalorder %s28, 1
      %p203 = por %p201, %p202
      %p205 = scmp.ne.s32.totalorder %s188, %s204
      %p206 = scmp.eq.s32.totalorder %s28, 0
      %p207 = por %p205, %p206
      %p208 = scmp.le.s32.totalorder 1, %s22
      %p209 = scmp.lt.s32.totalorder %s22, 3
      %p210 = pnand %p208, %p209
      %p211 = pneg %p210
      // Predicated region
      $region9: #{tpu_custom_call.1} parent=5 // pred_check
        _
      $region10: #{tpu_custom_call.1} parent=5 // pred_check_branch
        %213 = sbr.rel (%p210) target = $region12
      $region11: #{tpu_custom_call.1} parent=5 // pred_region
        %s214 = ssub.s32 %s22, 1
        // Predicated region
        $region13: #{tpu_custom_call.1} parent=11 // pred_check
          %p215 = pneg %p69
        $region14: #{tpu_custom_call.1} parent=11 // pred_check_branch
          %217 = sbr.rel (%p215) target = $region16
        $region15: #{tpu_custom_call.1} parent=11 // pred_region
          %s219 = ssub.s32 2048, 2048
          %220 = vsyncadd [#allocation6], %s219
          %s221 = sshll.u32 [#allocation5], 4
          %s222 = int_to_ptr.vmem [resolvable:$true] %s221
          %227 = dma.hbm_to_vmem [thread:$0]  %s1, 2048, %s222, [#allocation6], 128, 128, 8
        $region16: #{tpu_custom_call.1} parent=11 // pred_fallthru
          _
        // Predicated region
        $region17: #{tpu_custom_call.1} parent=11 // pred_check
          %p228 = pneg %p90
        $region18: #{tpu_custom_call.1} parent=11 // pred_check_branch
          %230 = sbr.rel (%p228) target = $region20
        $region19: #{tpu_custom_call.1} parent=11 // pred_region
          %s232 = ssub.s32 6144, 6144
          %233 = vsyncadd [#allocation6], %s232
          %s234 = sshll.u32 [#allocation7], 4
          %s235 = int_to_ptr.vmem [resolvable:$true] %s234
          %240 = dma.hbm_to_vmem [thread:$0]  %s2, 6144, %s235, [#allocation6], 128, 128, 8
        $region20: #{tpu_custom_call.1} parent=11 // pred_fallthru
          _
        // Predicated region
        $region21: #{tpu_custom_call.1} parent=11 // pred_check
          %p241 = pneg %p111
        $region22: #{tpu_custom_call.1} parent=11 // pred_check_branch
          %243 = sbr.rel (%p241) target = $region24
        $region23: #{tpu_custom_call.1} parent=11 // pred_region
          %s245 = ssub.s32 2048, 2048
          %246 = vsyncadd [#allocation9], %s245
          %s247 = sshll.u32 [#allocation8], 4
          %s248 = int_to_ptr.vmem [resolvable:$true] %s247
          %253 = dma.hbm_to_vmem [thread:$0]  %s3, 2048, %s248, [#allocation9], 128, 128, 8
        $region24: #{tpu_custom_call.1} parent=11 // pred_fallthru
          _
        // Predicated region
        $region25: #{tpu_custom_call.1} parent=11 // pred_check
          %p254 = pneg %p132
        $region26: #{tpu_custom_call.1} parent=11 // pred_check_branch
          %256 = sbr.rel (%p254) target = $region28
        $region27: #{tpu_custom_call.1} parent=11 // pred_region
          %s258 = ssub.s32 6144, 6144
          %259 = vsyncadd [#allocation9], %s258
          %s260 = sshll.u32 [#allocation10], 4
          %s261 = int_to_ptr.vmem [resolvable:$true] %s260
          %266 = dma.hbm_to_vmem [thread:$0]  %s4, 6144, %s261, [#allocation9], 128, 128, 8
        $region28: #{tpu_custom_call.1} parent=11 // pred_fallthru
          _
        // Predicated region
        $region29: #{tpu_custom_call.1} parent=11 // pred_check
          %p267 = pneg %p153
        $region30: #{tpu_custom_call.1} parent=11 // pred_check_branch
          %269 = sbr.rel (%p267) target = $region32
        $region31: #{tpu_custom_call.1} parent=11 // pred_region
          %s271 = ssub.s32 2048, 2048
          %272 = vsyncadd [#allocation12], %s271
          %s273 = sshll.u32 [#allocation11], 4
          %s274 = int_to_ptr.vmem [resolvable:$true] %s273
          %279 = dma.hbm_to_vmem [thread:$0]  %s5, 2048, %s274, [#allocation12], 128, 128, 8
        $region32: #{tpu_custom_call.1} parent=11 // pred_fallthru
          _
        // Predicated region
        $region33: #{tpu_custom_call.1} parent=11 // pred_check
          %p280 = pneg %p174
        $region34: #{tpu_custom_call.1} parent=11 // pred_check_branch
          %282 = sbr.rel (%p280) target = $region36
        $region35: #{tpu_custom_call.1} parent=11 // pred_region
          _
        $region36: #{tpu_custom_call.1} parent=11 // pred_fallthru
          _
      $region12: #{tpu_custom_call.1} parent=5 // pred_fallthru
        _
      %p283 = scmp.lt.s32.totalorder %s22, 2
      // Predicated region
      $region37: #{tpu_custom_call.1} parent=5 // pred_check
        %p284 = pneg %p283
      $region38: #{tpu_custom_call.1} parent=5 // pred_check_branch
        %286 = sbr.rel (%p284) target = $region40
      $region39: #{tpu_custom_call.1} parent=5 // pred_region
        // Predicated region
        $region41: #{tpu_custom_call.1} parent=39 // pred_check
          %p287 = pneg %p42
        $region42: #{tpu_custom_call.1} parent=39 // pred_check_branch
          %289 = sbr.rel (%p287) target = $region44
        $region43: #{tpu_custom_call.1} parent=39 // pred_region
          %s290 = sand.u32 %s32, 1
          %s291 = scalar_lea.sflag [#allocation3], %s290
          %s292 = sand.u32 %s32, 1
          %s293 = smul.addr %s292, 16
          %s294 = scalar_lea.vmem [#allocation2], %s293
          %s296 = ssub.s32 256, 256
          %297 = vsyncadd %s291, %s296
          %s298 = smul.addr %s22, 2
          %s299 = smul.addr %s298, 128
          %s300 = scalar_lea.hbm %s0, %s299
          %s301 = sshll.u32 %s294, 4
          %s302 = int_to_ptr.vmem [resolvable:$true] %s301
          %307 = dma.hbm_to_vmem [thread:$0]  %s300, 256, %s302, %s291, 128, 128, 8
        $region44: #{tpu_custom_call.1} parent=39 // pred_fallthru
          _
      $region40: #{tpu_custom_call.1} parent=5 // pred_fallthru
        _
      %p308 = scmp.le.s32.totalorder 1, %s22
      %p309 = scmp.lt.s32.totalorder %s22, 3
      %p310 = pnand %p308, %p309
      %p311 = pneg %p310
      // Predicated region
      $region45: #{tpu_custom_call.1} parent=5 // pred_check
        _
      $region46: #{tpu_custom_call.1} parent=5 // pred_check_branch
        %313 = sbr.rel (%p310) target = $region48
      $region47: #{tpu_custom_call.1} parent=5 // pred_region
        %s314 = ssub.s32 %s22, 1
        %s315 = sand.u32 %s35, 1
        %s316 = scalar_lea.sflag [#allocation3], %s315
        %s317 = sand.u32 %s35, 1
        %s318 = smul.addr %s317, 16
        %s319 = scalar_lea.vmem [#allocation2], %s318
        // Predicated region
        $region49: #{tpu_custom_call.1} parent=47 // pred_check
          %p320 = pneg %p48
        $region50: #{tpu_custom_call.1} parent=47 // pred_check_branch
          %322 = sbr.rel (%p320) target = $region52
        $region51: #{tpu_custom_call.1} parent=47 // pred_region
          %323 = dma.done %s316, 256
        $region52: #{tpu_custom_call.1} parent=47 // pred_fallthru
          _
        // Predicated region
        $region53: #{tpu_custom_call.1} parent=47 // pred_check
          %p324 = pneg %p69
        $region54: #{tpu_custom_call.1} parent=47 // pred_check_branch
          %326 = sbr.rel (%p324) target = $region56
        $region55: #{tpu_custom_call.1} parent=47 // pred_region
          %327 = dma.done [#allocation6], 2048
        $region56: #{tpu_custom_call.1} parent=47 // pred_fallthru
          _
        // Predicated region
        $region57: #{tpu_custom_call.1} parent=47 // pred_check
          %p328 = pneg %p90
        $region58: #{tpu_custom_call.1} parent=47 // pred_check_branch
          %330 = sbr.rel (%p328) target = $region60
        $region59: #{tpu_custom_call.1} parent=47 // pred_region
          %331 = dma.done [#allocation6], 6144
        $region60: #{tpu_custom_call.1} parent=47 // pred_fallthru
          _
        // Predicated region
        $region61: #{tpu_custom_call.1} parent=47 // pred_check
          %p332 = pneg %p111
        $region62: #{tpu_custom_call.1} parent=47 // pred_check_branch
          %334 = sbr.rel (%p332) target = $region64
        $region63: #{tpu_custom_call.1} parent=47 // pred_region
          %335 = dma.done [#allocation9], 2048
        $region64: #{tpu_custom_call.1} parent=47 // pred_fallthru
          _
        // Predicated region
        $region65: #{tpu_custom_call.1} parent=47 // pred_check
          %p336 = pneg %p132
        $region66: #{tpu_custom_call.1} parent=47 // pred_check_branch
          %338 = sbr.rel (%p336) target = $region68
        $region67: #{tpu_custom_call.1} parent=47 // pred_region
          %339 = dma.done [#allocation9], 6144
        $region68: #{tpu_custom_call.1} parent=47 // pred_fallthru
          _
        // Predicated region
        $region69: #{tpu_custom_call.1} parent=47 // pred_check
          %p340 = pneg %p153
        $region70: #{tpu_custom_call.1} parent=47 // pred_check_branch
          %342 = sbr.rel (%p340) target = $region72
        $region71: #{tpu_custom_call.1} parent=47 // pred_region
          %343 = dma.done [#allocation12], 2048
        $region72: #{tpu_custom_call.1} parent=47 // pred_fallthru
          _
        %s344 = sand.u32 %s35, 1
        %s345 = scalar_lea.sflag [#allocation3], %s344
        %s346 = sand.u32 %s35, 1
        %s347 = smul.addr %s346, 16
        %s348 = scalar_lea.vmem [#allocation2], %s347
        %p349 = pneg %p48
        %p350 = pneg %p45
        %p351 = pneg %p69
        %p352 = pneg %p66
        %p353 = pneg %p90
        %p354 = pneg %p87
        %p355 = pneg %p111
        %p356 = pneg %p108
        %p357 = pneg %p132
        %p358 = pneg %p129
        %p359 = pneg %p153
        %p360 = pneg %p150
        %p361 = pneg %p174
        %p362 = pneg %p171
        %p363 = pneg %p200
        %p364 = pneg %p197
        %s365 = sand.u32 %s187, 1
        %s366 = scalar_lea.sflag [#allocation4], %s365
        %s367 = sand.u32 %s187, 1
        %s368 = smul.addr %s367, 16
        %s369 = scalar_lea.vmem [#allocation13], %s368
        %v370 = vld [vmem:[%s319] sm:$0xff]
        %v371 = vld [vmem:[%s319 + $0x8] sm:$0xff]
        %v372 = vld [vmem:[#allocation5] sm:$0xff]
        %v373 = vld [vmem:[#allocation5 + $0x8] sm:$0xff]
        %v374 = vld [vmem:[#allocation5 + $0x10] sm:$0xff]
        %v375 = vld [vmem:[#allocation5 + $0x18] sm:$0xff]
        %v376 = vld [vmem:[#allocation5 + $0x20] sm:$0xff]
        %v377 = vld [vmem:[#allocation5 + $0x28] sm:$0xff]
        %v378 = vld [vmem:[#allocation5 + $0x30] sm:$0xff]
        %v379 = vld [vmem:[#allocation5 + $0x38] sm:$0xff]
        %v380 = vld [vmem:[#allocation5 + $0x40] sm:$0xff]
        %v381 = vld [vmem:[#allocation5 + $0x48] sm:$0xff]
        %v382 = vld [vmem:[#allocation5 + $0x50] sm:$0xff]
        %v383 = vld [vmem:[#allocation5 + $0x58] sm:$0xff]
        %v384 = vld [vmem:[#allocation5 + $0x60] sm:$0xff]
        %v385 = vld [vmem:[#allocation5 + $0x68] sm:$0xff]
        %v386 = vld [vmem:[#allocation5 + $0x70] sm:$0xff]
        %v387 = vld [vmem:[#allocation5 + $0x78] sm:$0xff]
        %388 = vmatprep.subr.mxu0 0.0
        %389 = vmatpush1.msra.mxu0 %v372
        %390 = vmatprep.subr.mxu0 0.0
        %391 = vmatpush1.msra.mxu0 %v373
        %392 = vmatprep.subr.mxu0 0.0
        %393 = vmatpush1.msra.mxu0 %v374
        %394 = vmatprep.subr.mxu0 0.0
        %395 = vmatpush1.msra.mxu0 %v375
        %396 = vmatprep.subr.mxu0 0.0
        %397 = vmatpush1.msra.mxu0 %v376
        %398 = vmatprep.subr.mxu0 0.0
        %399 = vmatpush1.msra.mxu0 %v377
        %400 = vmatprep.subr.mxu0 0.0
        %401 = vmatpush1.msra.mxu0 %v378
        %402 = vmatprep.subr.mxu0 0.0
        %403 = vmatpush1.msra.mxu0 %v379
        %404 = vmatprep.subr.mxu0 0.0
        %405 = vmatpush1.msra.mxu0 %v380
        %406 = vmatprep.subr.mxu0 0.0
        %407 = vmatpush1.msra.mxu0 %v381
        %408 = vmatprep.subr.mxu0 0.0
        %409 = vmatpush1.msra.mxu0 %v382
        %410 = vmatprep.subr.mxu0 0.0
        %411 = vmatpush1.msra.mxu0 %v383
        %412 = vmatprep.subr.mxu0 0.0
        %413 = vmatpush1.msra.mxu0 %v384
        %414 = vmatprep.subr.mxu0 0.0
        %415 = vmatpush1.msra.mxu0 %v385
        %416 = vmatprep.subr.mxu0 0.0
        %417 = vmatpush1.msra.mxu0 %v386
        %418 = vmatprep.subr.mxu0 0.0
        %419 = vmatpush1.msra.mxu0 %v387
        %420 = vmatprep.subr.mxu0 0.0
        %421 = vmatpush1.msra.mxu0 0.0
        %422 = vmatprep.subr.mxu0 0.0
        %423 = vmatpush1.msra.mxu0 0.0
        %424 = vmatprep.subr.mxu0 0.0
        %425 = vmatpush1.msra.mxu0 0.0
        %426 = vmatprep.subr.mxu0 0.0
        %427 = vmatpush1.msra.mxu0 0.0
        %428 = vmatprep.subr.mxu0 0.0
        %429 = vmatpush1.msra.mxu0 0.0
        %430 = vmatprep.subr.mxu0 0.0
        %431 = vmatpush1.msra.mxu0 0.0
        %432 = vmatprep.subr.mxu0 0.0
        %433 = vmatpush1.msra.mxu0 0.0
        %434 = vmatprep.subr.mxu0 0.0
        %435 = vmatpush1.msra.mxu0 0.0
        %436 = vmatprep.subr.mxu0 0.0
        %437 = vmatpush1.msra.mxu0 0.0
        %438 = vmatprep.subr.mxu0 0.0
        %439 = vmatpush1.msra.mxu0 0.0
        %440 = vmatprep.subr.mxu0 0.0
        %441 = vmatpush1.msra.mxu0 0.0
        %442 = vmatprep.subr.mxu0 0.0
        %443 = vmatpush1.msra.mxu0 0.0
        %444 = vmatprep.subr.mxu0 0.0
        %445 = vmatpush1.msra.mxu0 0.0
        %446 = vmatprep.subr.mxu0 0.0
        %447 = vmatpush1.msra.mxu0 0.0
        %448 = vmatprep.subr.mxu0 0.0
        %449 = vmatpush1.msra.mxu0 0.0
        %450 = vmatprep.subr.mxu0 0.0
        %451 = vmatpush1.msra.mxu0 0.0
        %452 = vmatprep.mubr.f32.mxu0 0.0
        %453 = vmatmul.mubr.f32.gmra.mrb[0].mxu0 %v370
        %v454 = vpop.f32.mrb[0].mxu0
        %v455 = vadd.f32 0.0, %v454
        %v456 = vpop.f32.mrb[0].mxu0
        %457 = vmatprep.mubr.f32.mxu0 0.0
        %458 = vmatmul.mubr.f32.gmra.mrb[0].mxu0 %v371
        %v459 = vpop.f32.mrb[0].mxu0
        %v460 = vadd.f32 0.0, %v459
        %v461 = vpop.f32.mrb[0].mxu0
        %462 = vdwg.mxu0
        %v463 = vld [vmem:[%s6] sm:$0x1]
        %v464 = vld [vmem:[%s6 + $0x1] sm:$0x1]
        %v465 = vlaneseq
        %v466 = vshrl.u32 %v465, 7
        %v467 = vsub.s32 0, %v466
        %v468 = vrot.slane %v463, %v467
        %v469 = vmul.f32 %v455, %v468
        %v470 = vmul.f32 %v460, %v468
        %v471 = vlaneseq
        %v472 = vshrl.u32 %v471, 7
        %v473 = vsub.s32 0, %v472
        %v474 = vrot.slane %v464, %v473
        %v475 = vadd.f32 %v469, %v474
        %v476 = vadd.f32 %v470, %v474
        %v477 = vmax.f32 %v475, 0.0
        %v478 = vmax.f32 %v476, 0.0
        %vm481 = vcmask 1040384
        %v482 = vrot.slane %v477, 7
        %v483 = vrot.slane %v478, 7
        %v484 = vsel %vm481, %v482, %v483
        %v487 = vsel %vm481, 0.0, %v482
        %vm488 = vcmask 1046528
        %v489 = vrot.slane %v477, 1
        %v490 = vrot.slane %v478, 1
        %v491 = vsel %vm488, %v489, %v490
        %v494 = vsel %vm488, %v490, 0.0
        %v495 = vld [vmem:[#allocation7] sm:$0xff]
        %v496 = vld [vmem:[#allocation7 + $0x8] sm:$0xff]
        %v497 = vld [vmem:[#allocation7 + $0x10] sm:$0xff]
        %v498 = vld [vmem:[#allocation7 + $0x18] sm:$0xff]
        %v499 = vld [vmem:[#allocation7 + $0x20] sm:$0xff]
        %v500 = vld [vmem:[#allocation7 + $0x28] sm:$0xff]
        %v501 = vld [vmem:[#allocation7 + $0x30] sm:$0xff]
        %v502 = vld [vmem:[#allocation7 + $0x38] sm:$0xff]
        %v503 = vld [vmem:[#allocation7 + $0x40] sm:$0xff]
        %v504 = vld [vmem:[#allocation7 + $0x48] sm:$0xff]
        %v505 = vld [vmem:[#allocation7 + $0x50] sm:$0xff]
        %v506 = vld [vmem:[#allocation7 + $0x58] sm:$0xff]
        %v507 = vld [vmem:[#allocation7 + $0x60] sm:$0xff]
        %v508 = vld [vmem:[#allocation7 + $0x68] sm:$0xff]
        %v509 = vld [vmem:[#allocation7 + $0x70] sm:$0xff]
        %v510 = vld [vmem:[#allocation7 + $0x78] sm:$0xff]
        %v511 = vld [vmem:[#allocation7 + $0x80] sm:$0xff]
        %v512 = vld [vmem:[#allocation7 + $0x88] sm:$0xff]
        %v513 = vld [vmem:[#allocation7 + $0x90] sm:$0xff]
        %v514 = vld [vmem:[#allocation7 + $0x98] sm:$0xff]
        %v515 = vld [vmem:[#allocation7 + $0xa0] sm:$0xff]
        %v516 = vld [vmem:[#allocation7 + $0xa8] sm:$0xff]
        %v517 = vld [vmem:[#allocation7 + $0xb0] sm:$0xff]
        %v518 = vld [vmem:[#allocation7 + $0xb8] sm:$0xff]
        %v519 = vld [vmem:[#allocation7 + $0xc0] sm:$0xff]
        %v520 = vld [vmem:[#allocation7 + $0xc8] sm:$0xff]
        %v521 = vld [vmem:[#allocation7 + $0xd0] sm:$0xff]
        %v522 = vld [vmem:[#allocation7 + $0xd8] sm:$0xff]
        %v523 = vld [vmem:[#allocation7 + $0xe0] sm:$0xff]
        %v524 = vld [vmem:[#allocation7 + $0xe8] sm:$0xff]
        %v525 = vld [vmem:[#allocation7 + $0xf0] sm:$0xff]
        %v526 = vld [vmem:[#allocation7 + $0xf8] sm:$0xff]
        %v527 = vld [vmem:[#allocation7 + $0x100] sm:$0xff]
        %v528 = vld [vmem:[#allocation7 + $0x108] sm:$0xff]
        %v529 = vld [vmem:[#allocation7 + $0x110] sm:$0xff]
        %v530 = vld [vmem:[#allocation7 + $0x118] sm:$0xff]
        %v531 = vld [vmem:[#allocation7 + $0x120] sm:$0xff]
        %v532 = vld [vmem:[#allocation7 + $0x128] sm:$0xff]
        %v533 = vld [vmem:[#allocation7 + $0x130] sm:$0xff]
        %v534 = vld [vmem:[#allocation7 + $0x138] sm:$0xff]
        %v535 = vld [vmem:[#allocation7 + $0x140] sm:$0xff]
        %v536 = vld [vmem:[#allocation7 + $0x148] sm:$0xff]
        %v537 = vld [vmem:[#allocation7 + $0x150] sm:$0xff]
        %v538 = vld [vmem:[#allocation7 + $0x158] sm:$0xff]
        %v539 = vld [vmem:[#allocation7 + $0x160] sm:$0xff]
        %v540 = vld [vmem:[#allocation7 + $0x168] sm:$0xff]
        %v541 = vld [vmem:[#allocation7 + $0x170] sm:$0xff]
        %v542 = vld [vmem:[#allocation7 + $0x178] sm:$0xff]
        %543 = vmatprep.subr.mxu0 0.0
        %544 = vmatpush1.msra.mxu0 %v495
        %545 = vmatprep.subr.mxu0 0.0
        %546 = vmatpush1.msra.mxu0 %v496
        %547 = vmatprep.subr.mxu0 0.0
        %548 = vmatpush1.msra.mxu0 %v497
        %549 = vmatprep.subr.mxu0 0.0
        %550 = vmatpush1.msra.mxu0 %v498
        %551 = vmatprep.subr.mxu0 0.0
        %552 = vmatpush1.msra.mxu0 %v499
        %553 = vmatprep.subr.mxu0 0.0
        %554 = vmatpush1.msra.mxu0 %v500
        %555 = vmatprep.subr.mxu0 0.0
        %556 = vmatpush1.msra.mxu0 %v501
        %557 = vmatprep.subr.mxu0 0.0
        %558 = vmatpush1.msra.mxu0 %v502
        %559 = vmatprep.subr.mxu0 0.0
        %560 = vmatpush1.msra.mxu0 %v503
        %561 = vmatprep.subr.mxu0 0.0
        %562 = vmatpush1.msra.mxu0 %v504
        %563 = vmatprep.subr.mxu0 0.0
        %564 = vmatpush1.msra.mxu0 %v505
        %565 = vmatprep.subr.mxu0 0.0
        %566 = vmatpush1.msra.mxu0 %v506
        %567 = vmatprep.subr.mxu0 0.0
        %568 = vmatpush1.msra.mxu0 %v507
        %569 = vmatprep.subr.mxu0 0.0
        %570 = vmatpush1.msra.mxu0 %v508
        %571 = vmatprep.subr.mxu0 0.0
        %572 = vmatpush1.msra.mxu0 %v509
        %573 = vmatprep.subr.mxu0 0.0
        %574 = vmatpush1.msra.mxu0 %v510
        %575 = vmatprep.subr.mxu0 0.0
        %576 = vmatpush1.msra.mxu0 %v511
        %577 = vmatprep.subr.mxu0 0.0
        %578 = vmatpush1.msra.mxu0 %v512
        %579 = vmatprep.subr.mxu0 0.0
        %580 = vmatpush1.msra.mxu0 %v513
        %581 = vmatprep.subr.mxu0 0.0
        %582 = vmatpush1.msra.mxu0 %v514
        %583 = vmatprep.subr.mxu0 0.0
        %584 = vmatpush1.msra.mxu0 %v515
        %585 = vmatprep.subr.mxu0 0.0
        %586 = vmatpush1.msra.mxu0 %v516
        %587 = vmatprep.subr.mxu0 0.0
        %588 = vmatpush1.msra.mxu0 %v517
        %589 = vmatprep.subr.mxu0 0.0
        %590 = vmatpush1.msra.mxu0 %v518
        %591 = vmatprep.subr.mxu0 0.0
        %592 = vmatpush1.msra.mxu0 %v519
        %593 = vmatprep.subr.mxu0 0.0
        %594 = vmatpush1.msra.mxu0 %v520
        %595 = vmatprep.subr.mxu0 0.0
        %596 = vmatpush1.msra.mxu0 %v521
        %597 = vmatprep.subr.mxu0 0.0
        %598 = vmatpush1.msra.mxu0 %v522
        %599 = vmatprep.subr.mxu0 0.0
        %600 = vmatpush1.msra.mxu0 %v523
        %601 = vmatprep.subr.mxu0 0.0
        %602 = vmatpush1.msra.mxu0 %v524
        %603 = vmatprep.subr.mxu0 0.0
        %604 = vmatpush1.msra.mxu0 %v525
        %605 = vmatprep.subr.mxu0 0.0
        %606 = vmatpush1.msra.mxu0 %v526
        %607 = vmatprep.mubr.f32.mxu0 %v477
        %608 = vmatmul.mubr.f32.gmra.mrb[0].mxu0 %v487
        %v609 = vpop.f32.mrb[0].mxu0
        %v610 = vadd.f32 0.0, %v609
        %v611 = vpop.f32.mrb[0].mxu0
        %612 = vmatprep.mubr.f32.mxu0 %v478
        %613 = vmatmul.mubr.f32.gmra.mrb[0].mxu0 %v484
        %v614 = vpop.f32.mrb[0].mxu0
        %v615 = vadd.f32 0.0, %v614
        %v616 = vpop.f32.mrb[0].mxu0
        %617 = vdwg.mxu0
        %618 = vmatprep.subr.mxu0 0.0
        %619 = vmatpush1.msra.mxu0 %v527
        %620 = vmatprep.subr.mxu0 0.0
        %621 = vmatpush1.msra.mxu0 %v528
        %622 = vmatprep.subr.mxu0 0.0
        %623 = vmatpush1.msra.mxu0 %v529
        %624 = vmatprep.subr.mxu0 0.0
        %625 = vmatpush1.msra.mxu0 %v530
        %626 = vmatprep.subr.mxu0 0.0
        %627 = vmatpush1.msra.mxu0 %v531
        %628 = vmatprep.subr.mxu0 0.0
        %629 = vmatpush1.msra.mxu0 %v532
        %630 = vmatprep.subr.mxu0 0.0
        %631 = vmatpush1.msra.mxu0 %v533
        %632 = vmatprep.subr.mxu0 0.0
        %633 = vmatpush1.msra.mxu0 %v534
        %634 = vmatprep.subr.mxu0 0.0
        %635 = vmatpush1.msra.mxu0 %v535
        %636 = vmatprep.subr.mxu0 0.0
        %637 = vmatpush1.msra.mxu0 %v536
        %638 = vmatprep.subr.mxu0 0.0
        %639 = vmatpush1.msra.mxu0 %v537
        %640 = vmatprep.subr.mxu0 0.0
        %641 = vmatpush1.msra.mxu0 %v538
        %642 = vmatprep.subr.mxu0 0.0
        %643 = vmatpush1.msra.mxu0 %v539
        %644 = vmatprep.subr.mxu0 0.0
        %645 = vmatpush1.msra.mxu0 %v540
        %646 = vmatprep.subr.mxu0 0.0
        %647 = vmatpush1.msra.mxu0 %v541
        %648 = vmatprep.subr.mxu0 0.0
        %649 = vmatpush1.msra.mxu0 %v542
        %650 = vmatprep.subr.mxu0 0.0
        %651 = vmatpush1.msra.mxu0 0.0
        %652 = vmatprep.subr.mxu0 0.0
        %653 = vmatpush1.msra.mxu0 0.0
        %654 = vmatprep.subr.mxu0 0.0
        %655 = vmatpush1.msra.mxu0 0.0
        %656 = vmatprep.subr.mxu0 0.0
        %657 = vmatpush1.msra.mxu0 0.0
        %658 = vmatprep.subr.mxu0 0.0
        %659 = vmatpush1.msra.mxu0 0.0
        %660 = vmatprep.subr.mxu0 0.0
        %661 = vmatpush1.msra.mxu0 0.0
        %662 = vmatprep.subr.mxu0 0.0
        %663 = vmatpush1.msra.mxu0 0.0
        %664 = vmatprep.subr.mxu0 0.0
        %665 = vmatpush1.msra.mxu0 0.0
        %666 = vmatprep.subr.mxu0 0.0
        %667 = vmatpush1.msra.mxu0 0.0
        %668 = vmatprep.subr.mxu0 0.0
        %669 = vmatpush1.msra.mxu0 0.0
        %670 = vmatprep.subr.mxu0 0.0
        %671 = vmatpush1.msra.mxu0 0.0
        %672 = vmatprep.subr.mxu0 0.0
        %673 = vmatpush1.msra.mxu0 0.0
        %674 = vmatprep.subr.mxu0 0.0
        %675 = vmatpush1.msra.mxu0 0.0
        %676 = vmatprep.subr.mxu0 0.0
        %677 = vmatpush1.msra.mxu0 0.0
        %678 = vmatprep.subr.mxu0 0.0
        %679 = vmatpush1.msra.mxu0 0.0
        %680 = vmatprep.subr.mxu0 0.0
        %681 = vmatpush1.msra.mxu0 0.0
        %682 = vmatprep.mubr.f32.mxu0 0.0
        %683 = vmatmul.mubr.f32.gmra.mrb[0].mxu0 %v491
        %v684 = vpop.f32.mrb[0].mxu0
        %v685 = vadd.f32 %v610, %v684
        %v686 = vpop.f32.mrb[0].mxu0
        %687 = vmatprep.mubr.f32.mxu0 0.0
        %688 = vmatmul.mubr.f32.gmra.mrb[0].mxu0 %v494
        %v689 = vpop.f32.mrb[0].mxu0
        %v690 = vadd.f32 %v615, %v689
        %v691 = vpop.f32.mrb[0].mxu0
        %692 = vdwg.mxu0
        %v693 = vld [vmem:[%s6 + $0x2] sm:$0x1]
        %v694 = vld [vmem:[%s6 + $0x3] sm:$0x1]
        %v695 = vlaneseq
        %v696 = vshrl.u32 %v695, 7
        %v697 = vsub.s32 0, %v696
        %v698 = vrot.slane %v693, %v697
        %v699 = vmul.f32 %v685, %v698
        %v700 = vmul.f32 %v690, %v698
        %v701 = vlaneseq
        %v702 = vshrl.u32 %v701, 7
        %v703 = vsub.s32 0, %v702
        %v704 = vrot.slane %v694, %v703
        %v705 = vadd.f32 %v699, %v704
        %v706 = vadd.f32 %v700, %v704
        %v707 = vmax.f32 %v705, 0.0
        %v708 = vmax.f32 %v706, 0.0
        %v709 = vld [vmem:[#allocation8] sm:$0xff]
        %v710 = vld [vmem:[#allocation8 + $0x8] sm:$0xff]
        %v711 = vld [vmem:[#allocation8 + $0x10] sm:$0xff]
        %v712 = vld [vmem:[#allocation8 + $0x18] sm:$0xff]
        %v713 = vld [vmem:[#allocation8 + $0x20] sm:$0xff]
        %v714 = vld [vmem:[#allocation8 + $0x28] sm:$0xff]
        %v715 = vld [vmem:[#allocation8 + $0x30] sm:$0xff]
        %v716 = vld [vmem:[#allocation8 + $0x38] sm:$0xff]
        %v717 = vld [vmem:[#allocation8 + $0x40] sm:$0xff]
        %v718 = vld [vmem:[#allocation8 + $0x48] sm:$0xff]
        %v719 = vld [vmem:[#allocation8 + $0x50] sm:$0xff]
        %v720 = vld [vmem:[#allocation8 + $0x58] sm:$0xff]
        %v721 = vld [vmem:[#allocation8 + $0x60] sm:$0xff]
        %v722 = vld [vmem:[#allocation8 + $0x68] sm:$0xff]
        %v723 = vld [vmem:[#allocation8 + $0x70] sm:$0xff]
        %v724 = vld [vmem:[#allocation8 + $0x78] sm:$0xff]
        %725 = vmatprep.subr.mxu0 0.0
        %726 = vmatpush1.msra.mxu0 %v709
        %727 = vmatprep.subr.mxu0 0.0
        %728 = vmatpush1.msra.mxu0 %v710
        %729 = vmatprep.subr.mxu0 0.0
        %730 = vmatpush1.msra.mxu0 %v711
        %731 = vmatprep.subr.mxu0 0.0
        %732 = vmatpush1.msra.mxu0 %v712
        %733 = vmatprep.subr.mxu0 0.0
        %734 = vmatpush1.msra.mxu0 %v713
        %735 = vmatprep.subr.mxu0 0.0
        %736 = vmatpush1.msra.mxu0 %v714
        %737 = vmatprep.subr.mxu0 0.0
        %738 = vmatpush1.msra.mxu0 %v715
        %739 = vmatprep.subr.mxu0 0.0
        %740 = vmatpush1.msra.mxu0 %v716
        %741 = vmatprep.subr.mxu0 0.0
        %742 = vmatpush1.msra.mxu0 %v717
        %743 = vmatprep.subr.mxu0 0.0
        %744 = vmatpush1.msra.mxu0 %v718
        %745 = vmatprep.subr.mxu0 0.0
        %746 = vmatpush1.msra.mxu0 %v719
        %747 = vmatprep.subr.mxu0 0.0
        %748 = vmatpush1.msra.mxu0 %v720
        %749 = vmatprep.subr.mxu0 0.0
        %750 = vmatpush1.msra.mxu0 %v721
        %751 = vmatprep.subr.mxu0 0.0
        %752 = vmatpush1.msra.mxu0 %v722
        %753 = vmatprep.subr.mxu0 0.0
        %754 = vmatpush1.msra.mxu0 %v723
        %755 = vmatprep.subr.mxu0 0.0
        %756 = vmatpush1.msra.mxu0 %v724
        %757 = vmatprep.subr.mxu0 0.0
        %758 = vmatpush1.msra.mxu0 0.0
        %759 = vmatprep.subr.mxu0 0.0
        %760 = vmatpush1.msra.mxu0 0.0
        %761 = vmatprep.subr.mxu0 0.0
        %762 = vmatpush1.msra.mxu0 0.0
        %763 = vmatprep.subr.mxu0 0.0
        %764 = vmatpush1.msra.mxu0 0.0
        %765 = vmatprep.subr.mxu0 0.0
        %766 = vmatpush1.msra.mxu0 0.0
        %767 = vmatprep.subr.mxu0 0.0
        %768 = vmatpush1.msra.mxu0 0.0
        %769 = vmatprep.subr.mxu0 0.0
        %770 = vmatpush1.msra.mxu0 0.0
        %771 = vmatprep.subr.mxu0 0.0
        %772 = vmatpush1.msra.mxu0 0.0
        %773 = vmatprep.subr.mxu0 0.0
        %774 = vmatpush1.msra.mxu0 0.0
        %775 = vmatprep.subr.mxu0 0.0
        %776 = vmatpush1.msra.mxu0 0.0
        %777 = vmatprep.subr.mxu0 0.0
        %778 = vmatpush1.msra.mxu0 0.0
        %779 = vmatprep.subr.mxu0 0.0
        %780 = vmatpush1.msra.mxu0 0.0
        %781 = vmatprep.subr.mxu0 0.0
        %782 = vmatpush1.msra.mxu0 0.0
        %783 = vmatprep.subr.mxu0 0.0
        %784 = vmatpush1.msra.mxu0 0.0
        %785 = vmatprep.subr.mxu0 0.0
        %786 = vmatpush1.msra.mxu0 0.0
        %787 = vmatprep.subr.mxu0 0.0
        %788 = vmatpush1.msra.mxu0 0.0
        %789 = vmatprep.mubr.f32.mxu0 0.0
        %790 = vmatmul.mubr.f32.gmra.mrb[0].mxu0 %v707
        %v791 = vpop.f32.mrb[0].mxu0
        %v792 = vadd.f32 0.0, %v791
        %v793 = vpop.f32.mrb[0].mxu0
        %794 = vmatprep.mubr.f32.mxu0 0.0
        %795 = vmatmul.mubr.f32.gmra.mrb[0].mxu0 %v708
        %v796 = vpop.f32.mrb[0].mxu0
        %v797 = vadd.f32 0.0, %v796
        %v798 = vpop.f32.mrb[0].mxu0
        %799 = vdwg.mxu0
        %v800 = vld [vmem:[%s6 + $0x4] sm:$0x1]
        %v801 = vld [vmem:[%s6 + $0x5] sm:$0x1]
        %v802 = vlaneseq
        %v803 = vshrl.u32 %v802, 7
        %v804 = vsub.s32 0, %v803
        %v805 = vrot.slane %v800, %v804
        %v806 = vmul.f32 %v792, %v805
        %v807 = vmul.f32 %v797, %v805
        %v808 = vlaneseq
        %v809 = vshrl.u32 %v808, 7
        %v810 = vsub.s32 0, %v809
        %v811 = vrot.slane %v801, %v810
        %v812 = vadd.f32 %v806, %v811
        %v813 = vadd.f32 %v807, %v811
        %v814 = vmax.f32 %v812, 0.0
        %v815 = vmax.f32 %v813, 0.0
        %v816 = vadd.f32 %v814, %v477
        %v817 = vadd.f32 %v815, %v478
        %v820 = vrot.slane %v816, 7
        %v821 = vrot.slane %v817, 7
        %v822 = vsel %vm481, %v820, %v821
        %v825 = vsel %vm481, 0.0, %v820
        %v826 = vrot.slane %v816, 1
        %v827 = vrot.slane %v817, 1
        %v828 = vsel %vm488, %v826, %v827
        %v831 = vsel %vm488, %v827, 0.0
        %v832 = vld [vmem:[#allocation10] sm:$0xff]
        %v833 = vld [vmem:[#allocation10 + $0x8] sm:$0xff]
        %v834 = vld [vmem:[#allocation10 + $0x10] sm:$0xff]
        %v835 = vld [vmem:[#allocation10 + $0x18] sm:$0xff]
        %v836 = vld [vmem:[#allocation10 + $0x20] sm:$0xff]
        %v837 = vld [vmem:[#allocation10 + $0x28] sm:$0xff]
        %v838 = vld [vmem:[#allocation10 + $0x30] sm:$0xff]
        %v839 = vld [vmem:[#allocation10 + $0x38] sm:$0xff]
        %v840 = vld [vmem:[#allocation10 + $0x40] sm:$0xff]
        %v841 = vld [vmem:[#allocation10 + $0x48] sm:$0xff]
        %v842 = vld [vmem:[#allocation10 + $0x50] sm:$0xff]
        %v843 = vld [vmem:[#allocation10 + $0x58] sm:$0xff]
        %v844 = vld [vmem:[#allocation10 + $0x60] sm:$0xff]
        %v845 = vld [vmem:[#allocation10 + $0x68] sm:$0xff]
        %v846 = vld [vmem:[#allocation10 + $0x70] sm:$0xff]
        %v847 = vld [vmem:[#allocation10 + $0x78] sm:$0xff]
        %v848 = vld [vmem:[#allocation10 + $0x80] sm:$0xff]
        %v849 = vld [vmem:[#allocation10 + $0x88] sm:$0xff]
        %v850 = vld [vmem:[#allocation10 + $0x90] sm:$0xff]
        %v851 = vld [vmem:[#allocation10 + $0x98] sm:$0xff]
        %v852 = vld [vmem:[#allocation10 + $0xa0] sm:$0xff]
        %v853 = vld [vmem:[#allocation10 + $0xa8] sm:$0xff]
        %v854 = vld [vmem:[#allocation10 + $0xb0] sm:$0xff]
        %v855 = vld [vmem:[#allocation10 + $0xb8] sm:$0xff]
        %v856 = vld [vmem:[#allocation10 + $0xc0] sm:$0xff]
        %v857 = vld [vmem:[#allocation10 + $0xc8] sm:$0xff]
        %v858 = vld [vmem:[#allocation10 + $0xd0] sm:$0xff]
        %v859 = vld [vmem:[#allocation10 + $0xd8] sm:$0xff]
        %v860 = vld [vmem:[#allocation10 + $0xe0] sm:$0xff]
        %v861 = vld [vmem:[#allocation10 + $0xe8] sm:$0xff]
        %v862 = vld [vmem:[#allocation10 + $0xf0] sm:$0xff]
        %v863 = vld [vmem:[#allocation10 + $0xf8] sm:$0xff]
        %v864 = vld [vmem:[#allocation10 + $0x100] sm:$0xff]
        %v865 = vld [vmem:[#allocation10 + $0x108] sm:$0xff]
        %v866 = vld [vmem:[#allocation10 + $0x110] sm:$0xff]
        %v867 = vld [vmem:[#allocation10 + $0x118] sm:$0xff]
        %v868 = vld [vmem:[#allocation10 + $0x120] sm:$0xff]
        %v869 = vld [vmem:[#allocation10 + $0x128] sm:$0xff]
        %v870 = vld [vmem:[#allocation10 + $0x130] sm:$0xff]
        %v871 = vld [vmem:[#allocation10 + $0x138] sm:$0xff]
        %v872 = vld [vmem:[#allocation10 + $0x140] sm:$0xff]
        %v873 = vld [vmem:[#allocation10 + $0x148] sm:$0xff]
        %v874 = vld [vmem:[#allocation10 + $0x150] sm:$0xff]
        %v875 = vld [vmem:[#allocation10 + $0x158] sm:$0xff]
        %v876 = vld [vmem:[#allocation10 + $0x160] sm:$0xff]
        %v877 = vld [vmem:[#allocation10 + $0x168] sm:$0xff]
        %v878 = vld [vmem:[#allocation10 + $0x170] sm:$0xff]
        %v879 = vld [vmem:[#allocation10 + $0x178] sm:$0xff]
        %880 = vmatprep.subr.mxu0 0.0
        %881 = vmatpush1.msra.mxu0 %v832
        %882 = vmatprep.subr.mxu0 0.0
        %883 = vmatpush1.msra.mxu0 %v833
        %884 = vmatprep.subr.mxu0 0.0
        %885 = vmatpush1.msra.mxu0 %v834
        %886 = vmatprep.subr.mxu0 0.0
        %887 = vmatpush1.msra.mxu0 %v835
        %888 = vmatprep.subr.mxu0 0.0
        %889 = vmatpush1.msra.mxu0 %v836
        %890 = vmatprep.subr.mxu0 0.0
        %891 = vmatpush1.msra.mxu0 %v837
        %892 = vmatprep.subr.mxu0 0.0
        %893 = vmatpush1.msra.mxu0 %v838
        %894 = vmatprep.subr.mxu0 0.0
        %895 = vmatpush1.msra.mxu0 %v839
        %896 = vmatprep.subr.mxu0 0.0
        %897 = vmatpush1.msra.mxu0 %v840
        %898 = vmatprep.subr.mxu0 0.0
        %899 = vmatpush1.msra.mxu0 %v841
        %900 = vmatprep.subr.mxu0 0.0
        %901 = vmatpush1.msra.mxu0 %v842
        %902 = vmatprep.subr.mxu0 0.0
        %903 = vmatpush1.msra.mxu0 %v843
        %904 = vmatprep.subr.mxu0 0.0
        %905 = vmatpush1.msra.mxu0 %v844
        %906 = vmatprep.subr.mxu0 0.0
        %907 = vmatpush1.msra.mxu0 %v845
        %908 = vmatprep.subr.mxu0 0.0
        %909 = vmatpush1.msra.mxu0 %v846
        %910 = vmatprep.subr.mxu0 0.0
        %911 = vmatpush1.msra.mxu0 %v847
        %912 = vmatprep.subr.mxu0 0.0
        %913 = vmatpush1.msra.mxu0 %v848
        %914 = vmatprep.subr.mxu0 0.0
        %915 = vmatpush1.msra.mxu0 %v849
        %916 = vmatprep.subr.mxu0 0.0
        %917 = vmatpush1.msra.mxu0 %v850
        %918 = vmatprep.subr.mxu0 0.0
        %919 = vmatpush1.msra.mxu0 %v851
        %920 = vmatprep.subr.mxu0 0.0
        %921 = vmatpush1.msra.mxu0 %v852
        %922 = vmatprep.subr.mxu0 0.0
        %923 = vmatpush1.msra.mxu0 %v853
        %924 = vmatprep.subr.mxu0 0.0
        %925 = vmatpush1.msra.mxu0 %v854
        %926 = vmatprep.subr.mxu0 0.0
        %927 = vmatpush1.msra.mxu0 %v855
        %928 = vmatprep.subr.mxu0 0.0
        %929 = vmatpush1.msra.mxu0 %v856
        %930 = vmatprep.subr.mxu0 0.0
        %931 = vmatpush1.msra.mxu0 %v857
        %932 = vmatprep.subr.mxu0 0.0
        %933 = vmatpush1.msra.mxu0 %v858
        %934 = vmatprep.subr.mxu0 0.0
        %935 = vmatpush1.msra.mxu0 %v859
        %936 = vmatprep.subr.mxu0 0.0
        %937 = vmatpush1.msra.mxu0 %v860
        %938 = vmatprep.subr.mxu0 0.0
        %939 = vmatpush1.msra.mxu0 %v861
        %940 = vmatprep.subr.mxu0 0.0
        %941 = vmatpush1.msra.mxu0 %v862
        %942 = vmatprep.subr.mxu0 0.0
        %943 = vmatpush1.msra.mxu0 %v863
        %944 = vmatprep.mubr.f32.mxu0 %v816
        %945 = vmatmul.mubr.f32.gmra.mrb[0].mxu0 %v825
        %v946 = vpop.f32.mrb[0].mxu0
        %v947 = vadd.f32 0.0, %v946
        %v948 = vpop.f32.mrb[0].mxu0
        %949 = vmatprep.mubr.f32.mxu0 %v817
        %950 = vmatmul.mubr.f32.gmra.mrb[0].mxu0 %v822
        %v951 = vpop.f32.mrb[0].mxu0
        %v952 = vadd.f32 0.0, %v951
        %v953 = vpop.f32.mrb[0].mxu0
        %954 = vdwg.mxu0
        %955 = vmatprep.subr.mxu0 0.0
        %956 = vmatpush1.msra.mxu0 %v864
        %957 = vmatprep.subr.mxu0 0.0
        %958 = vmatpush1.msra.mxu0 %v865
        %959 = vmatprep.subr.mxu0 0.0
        %960 = vmatpush1.msra.mxu0 %v866
        %961 = vmatprep.subr.mxu0 0.0
        %962 = vmatpush1.msra.mxu0 %v867
        %963 = vmatprep.subr.mxu0 0.0
        %964 = vmatpush1.msra.mxu0 %v868
        %965 = vmatprep.subr.mxu0 0.0
        %966 = vmatpush1.msra.mxu0 %v869
        %967 = vmatprep.subr.mxu0 0.0
        %968 = vmatpush1.msra.mxu0 %v870
        %969 = vmatprep.subr.mxu0 0.0
        %970 = vmatpush1.msra.mxu0 %v871
        %971 = vmatprep.subr.mxu0 0.0
        %972 = vmatpush1.msra.mxu0 %v872
        %973 = vmatprep.subr.mxu0 0.0
        %974 = vmatpush1.msra.mxu0 %v873
        %975 = vmatprep.subr.mxu0 0.0
        %976 = vmatpush1.msra.mxu0 %v874
        %977 = vmatprep.subr.mxu0 0.0
        %978 = vmatpush1.msra.mxu0 %v875
        %979 = vmatprep.subr.mxu0 0.0
        %980 = vmatpush1.msra.mxu0 %v876
        %981 = vmatprep.subr.mxu0 0.0
        %982 = vmatpush1.msra.mxu0 %v877
        %983 = vmatprep.subr.mxu0 0.0
        %984 = vmatpush1.msra.mxu0 %v878
        %985 = vmatprep.subr.mxu0 0.0
        %986 = vmatpush1.msra.mxu0 %v879
        %987 = vmatprep.subr.mxu0 0.0
        %988 = vmatpush1.msra.mxu0 0.0
        %989 = vmatprep.subr.mxu0 0.0
        %990 = vmatpush1.msra.mxu0 0.0
        %991 = vmatprep.subr.mxu0 0.0
        %992 = vmatpush1.msra.mxu0 0.0
        %993 = vmatprep.subr.mxu0 0.0
        %994 = vmatpush1.msra.mxu0 0.0
        %995 = vmatprep.subr.mxu0 0.0
        %996 = vmatpush1.msra.mxu0 0.0
        %997 = vmatprep.subr.mxu0 0.0
        %998 = vmatpush1.msra.mxu0 0.0
        %999 = vmatprep.subr.mxu0 0.0
        %1000 = vmatpush1.msra.mxu0 0.0
        %1001 = vmatprep.subr.mxu0 0.0
        %1002 = vmatpush1.msra.mxu0 0.0
        %1003 = vmatprep.subr.mxu0 0.0
        %1004 = vmatpush1.msra.mxu0 0.0
        %1005 = vmatprep.subr.mxu0 0.0
        %1006 = vmatpush1.msra.mxu0 0.0
        %1007 = vmatprep.subr.mxu0 0.0
        %1008 = vmatpush1.msra.mxu0 0.0
        %1009 = vmatprep.subr.mxu0 0.0
        %1010 = vmatpush1.msra.mxu0 0.0
        %1011 = vmatprep.subr.mxu0 0.0
        %1012 = vmatpush1.msra.mxu0 0.0
        %1013 = vmatprep.subr.mxu0 0.0
        %1014 = vmatpush1.msra.mxu0 0.0
        %1015 = vmatprep.subr.mxu0 0.0
        %1016 = vmatpush1.msra.mxu0 0.0
        %1017 = vmatprep.subr.mxu0 0.0
        %1018 = vmatpush1.msra.mxu0 0.0
        %1019 = vmatprep.mubr.f32.mxu0 0.0
        %1020 = vmatmul.mubr.f32.gmra.mrb[0].mxu0 %v828
        %v1021 = vpop.f32.mrb[0].mxu0
        %v1022 = vadd.f32 %v947, %v1021
        %v1023 = vpop.f32.mrb[0].mxu0
        %1024 = vmatprep.mubr.f32.mxu0 0.0
        %1025 = vmatmul.mubr.f32.gmra.mrb[0].mxu0 %v831
        %v1026 = vpop.f32.mrb[0].mxu0
        %v1027 = vadd.f32 %v952, %v1026
        %v1028 = vpop.f32.mrb[0].mxu0
        %1029 = vdwg.mxu0
        %v1030 = vld [vmem:[%s6 + $0x6] sm:$0x1]
        %v1031 = vld [vmem:[%s6 + $0x7] sm:$0x1]
        %v1032 = vlaneseq
        %v1033 = vshrl.u32 %v1032, 7
        %v1034 = vsub.s32 0, %v1033
        %v1035 = vrot.slane %v1030, %v1034
        %v1036 = vmul.f32 %v1022, %v1035
        %v1037 = vmul.f32 %v1027, %v1035
        %v1038 = vlaneseq
        %v1039 = vshrl.u32 %v1038, 7
        %v1040 = vsub.s32 0, %v1039
        %v1041 = vrot.slane %v1031, %v1040
        %v1042 = vadd.f32 %v1036, %v1041
        %v1043 = vadd.f32 %v1037, %v1041
        %v1044 = vmax.f32 %v1042, 0.0
        %v1045 = vmax.f32 %v1043, 0.0
        %v1046 = vadd.f32 %v1044, %v707
        %v1047 = vadd.f32 %v1045, %v708
        %v1048 = vld [vmem:[#allocation11] sm:$0xff]
        %v1049 = vld [vmem:[#allocation11 + $0x8] sm:$0xff]
        %v1050 = vld [vmem:[#allocation11 + $0x10] sm:$0xff]
        %v1051 = vld [vmem:[#allocation11 + $0x18] sm:$0xff]
        %v1052 = vld [vmem:[#allocation11 + $0x20] sm:$0xff]
        %v1053 = vld [vmem:[#allocation11 + $0x28] sm:$0xff]
        %v1054 = vld [vmem:[#allocation11 + $0x30] sm:$0xff]
        %v1055 = vld [vmem:[#allocation11 + $0x38] sm:$0xff]
        %v1056 = vld [vmem:[#allocation11 + $0x40] sm:$0xff]
        %v1057 = vld [vmem:[#allocation11 + $0x48] sm:$0xff]
        %v1058 = vld [vmem:[#allocation11 + $0x50] sm:$0xff]
        %v1059 = vld [vmem:[#allocation11 + $0x58] sm:$0xff]
        %v1060 = vld [vmem:[#allocation11 + $0x60] sm:$0xff]
        %v1061 = vld [vmem:[#allocation11 + $0x68] sm:$0xff]
        %v1062 = vld [vmem:[#allocation11 + $0x70] sm:$0xff]
        %v1063 = vld [vmem:[#allocation11 + $0x78] sm:$0xff]
        %1064 = vmatprep.subr.mxu0 0.0
        %1065 = vmatpush1.msra.mxu0 %v1048
        %1066 = vmatprep.subr.mxu0 0.0
        %1067 = vmatpush1.msra.mxu0 %v1049
        %1068 = vmatprep.subr.mxu0 0.0
        %1069 = vmatpush1.msra.mxu0 %v1050
        %1070 = vmatprep.subr.mxu0 0.0
        %1071 = vmatpush1.msra.mxu0 %v1051
        %1072 = vmatprep.subr.mxu0 0.0
        %1073 = vmatpush1.msra.mxu0 %v1052
        %1074 = vmatprep.subr.mxu0 0.0
        %1075 = vmatpush1.msra.mxu0 %v1053
        %1076 = vmatprep.subr.mxu0 0.0
        %1077 = vmatpush1.msra.mxu0 %v1054
        %1078 = vmatprep.subr.mxu0 0.0
        %1079 = vmatpush1.msra.mxu0 %v1055
        %1080 = vmatprep.subr.mxu0 0.0
        %1081 = vmatpush1.msra.mxu0 %v1056
        %1082 = vmatprep.subr.mxu0 0.0
        %1083 = vmatpush1.msra.mxu0 %v1057
        %1084 = vmatprep.subr.mxu0 0.0
        %1085 = vmatpush1.msra.mxu0 %v1058
        %1086 = vmatprep.subr.mxu0 0.0
        %1087 = vmatpush1.msra.mxu0 %v1059
        %1088 = vmatprep.subr.mxu0 0.0
        %1089 = vmatpush1.msra.mxu0 %v1060
        %1090 = vmatprep.subr.mxu0 0.0
        %1091 = vmatpush1.msra.mxu0 %v1061
        %1092 = vmatprep.subr.mxu0 0.0
        %1093 = vmatpush1.msra.mxu0 %v1062
        %1094 = vmatprep.subr.mxu0 0.0
        %1095 = vmatpush1.msra.mxu0 %v1063
        %1096 = vmatprep.subr.mxu0 0.0
        %1097 = vmatpush1.msra.mxu0 0.0
        %1098 = vmatprep.subr.mxu0 0.0
        %1099 = vmatpush1.msra.mxu0 0.0
        %1100 = vmatprep.subr.mxu0 0.0
        %1101 = vmatpush1.msra.mxu0 0.0
        %1102 = vmatprep.subr.mxu0 0.0
        %1103 = vmatpush1.msra.mxu0 0.0
        %1104 = vmatprep.subr.mxu0 0.0
        %1105 = vmatpush1.msra.mxu0 0.0
        %1106 = vmatprep.subr.mxu0 0.0
        %1107 = vmatpush1.msra.mxu0 0.0
        %1108 = vmatprep.subr.mxu0 0.0
        %1109 = vmatpush1.msra.mxu0 0.0
        %1110 = vmatprep.subr.mxu0 0.0
        %1111 = vmatpush1.msra.mxu0 0.0
        %1112 = vmatprep.subr.mxu0 0.0
        %1113 = vmatpush1.msra.mxu0 0.0
        %1114 = vmatprep.subr.mxu0 0.0
        %1115 = vmatpush1.msra.mxu0 0.0
        %1116 = vmatprep.subr.mxu0 0.0
        %1117 = vmatpush1.msra.mxu0 0.0
        %1118 = vmatprep.subr.mxu0 0.0
        %1119 = vmatpush1.msra.mxu0 0.0
        %1120 = vmatprep.subr.mxu0 0.0
        %1121 = vmatpush1.msra.mxu0 0.0
        %1122 = vmatprep.subr.mxu0 0.0
        %1123 = vmatpush1.msra.mxu0 0.0
        %1124 = vmatprep.subr.mxu0 0.0
        %1125 = vmatpush1.msra.mxu0 0.0
        %1126 = vmatprep.subr.mxu0 0.0
        %1127 = vmatpush1.msra.mxu0 0.0
        %1128 = vmatprep.mubr.f32.mxu0 0.0
        %1129 = vmatmul.mubr.f32.gmra.mrb[0].mxu0 %v1046
        %v1130 = vpop.f32.mrb[0].mxu0
        %v1131 = vadd.f32 0.0, %v1130
        %v1132 = vpop.f32.mrb[0].mxu0
        %1133 = vmatprep.mubr.f32.mxu0 0.0
        %1134 = vmatmul.mubr.f32.gmra.mrb[0].mxu0 %v1047
        %v1135 = vpop.f32.mrb[0].mxu0
        %v1136 = vadd.f32 0.0, %v1135
        %v1137 = vpop.f32.mrb[0].mxu0
        %1138 = vdwg.mxu0
        %v1139 = vld [vmem:[%s6 + $0x8] sm:$0x1]
        %v1140 = vld [vmem:[%s6 + $0x9] sm:$0x1]
        %v1141 = vlaneseq
        %v1142 = vshrl.u32 %v1141, 7
        %v1143 = vsub.s32 0, %v1142
        %v1144 = vrot.slane %v1139, %v1143
        %v1145 = vmul.f32 %v1131, %v1144
        %v1146 = vmul.f32 %v1136, %v1144
        %v1147 = vlaneseq
        %v1148 = vshrl.u32 %v1147, 7
        %v1149 = vsub.s32 0, %v1148
        %v1150 = vrot.slane %v1140, %v1149
        %v1151 = vadd.f32 %v1145, %v1150
        %v1152 = vadd.f32 %v1146, %v1150
        %v1153 = vmax.f32 %v1151, 0.0
        %v1154 = vmax.f32 %v1152, 0.0
        %1155 = vst [vmem:[%s369] sm:$0xff] %v1153
        %1156 = vst [vmem:[%s369 + $0x8] sm:$0xff] %v1154
        %s1157 = sand.u32 %s187, 1
        %s1158 = scalar_lea.sflag [#allocation4], %s1157
        %s1159 = sand.u32 %s187, 1
        %s1160 = smul.addr %s1159, 16
        %s1161 = scalar_lea.vmem [#allocation13], %s1160
        // Predicated region
        $region73: #{tpu_custom_call.1} parent=47 // pred_check
          %p1162 = pneg %p197
        $region74: #{tpu_custom_call.1} parent=47 // pred_check_branch
          %1164 = sbr.rel (%p1162) target = $region76
        $region75: #{tpu_custom_call.1} parent=47 // pred_region
          %s1166 = ssub.s32 256, 256
          %1167 = vsyncadd %s1158, %s1166
          %s1168 = smul.addr %s27, 2
          %s1169 = smul.addr %s1168, 128
          %s1170 = scalar_lea.hbm %s7, %s1169
          %s1171 = sshll.u32 %s1161, 4
          %s1172 = int_to_ptr.vmem [resolvable:$true] %s1171
          %1177 = dma.vmem_to_hbm [thread:$0]  %s1172, 256, %s1170, %s1158, 128, 128, 8
        $region76: #{tpu_custom_call.1} parent=47 // pred_fallthru
          _
      $region48: #{tpu_custom_call.1} parent=5 // pred_fallthru
        _
      %p1178 = scmp.le.s32.totalorder 2, %s22
      // Predicated region
      $region77: #{tpu_custom_call.1} parent=5 // pred_check
        %p1179 = pneg %p1178
      $region78: #{tpu_custom_call.1} parent=5 // pred_check_branch
        %1181 = sbr.rel (%p1179) target = $region80
      $region79: #{tpu_custom_call.1} parent=5 // pred_region
        %s1182 = ssub.s32 %s22, 2
        // Predicated region
        $region81: #{tpu_custom_call.1} parent=79 // pred_check
          %p1183 = pneg %p203
        $region82: #{tpu_custom_call.1} parent=79 // pred_check_branch
          %1185 = sbr.rel (%p1183) target = $region84
        $region83: #{tpu_custom_call.1} parent=79 // pred_region
          %s1186 = sand.u32 %s188, 1
          %s1187 = scalar_lea.sflag [#allocation4], %s1186
          %s1188 = sand.u32 %s188, 1
          %s1189 = smul.addr %s1188, 16
          %s1190 = scalar_lea.vmem [#allocation13], %s1189
          %1191 = dma.done %s1187, 256
        $region84: #{tpu_custom_call.1} parent=79 // pred_fallthru
          _
      $region80: #{tpu_custom_call.1} parent=5 // pred_fallthru
        _
    $region6: #{tpu_custom_call.1} parent=1 // loop_footer
      %s26 = sadd.s32 1, %s22
    $region7: #{tpu_custom_call.1} parent=1 // loop_footer_branch
      %21 = sbr.rel target = $region3
    $region8: #{tpu_custom_call.1} parent=1 // loop_exit
      _
    %1192 = vsyncpa [#allocation3], 1
    %s1193 = scalar_lea.sflag [#allocation3], 1
    %1194 = vsyncpa %s1193, 1
    %1195 = vsyncpa [#allocation6], 1
    %1196 = vsyncpa [#allocation9], 1
    %1197 = vsyncpa [#allocation12], 1
    %1198 = vsyncpa [#allocation4], 1
    %s1199 = scalar_lea.sflag [#allocation4], 1
    %1200 = vsyncpa %s1199, 1

</llo_original>
